<compile_context>
chip_gen: v7x
topology: tpu7x:2x2x1
jax: 0.10.0
libtpu: 0.0.40
codegen_flags: <defaults>
</compile_context>

<pallas_src>
import functools

import jax
import jax.numpy as jnp
from jax import lax
from jax.experimental import pallas as pl
from jax.experimental.pallas import tpu as pltpu

# Large finite negative instead of -inf: avoids NaN propagation for fully
# masked rows (exp(-inf - -inf), 1/0) while underflowing to exactly 0 in exp.
MASK_VALUE = -1e30


# --------------------------------------------------------------------------- #
# Kernel 1: K / V projections into a head-major (n, H, c, hd) layout.
# --------------------------------------------------------------------------- #
def _kv_proj_kernel(n_heads,
                    xk_ref, xv_ref, wk_ref, bk_ref, wv_ref, bv_ref,
                    k_out_ref, v_out_ref):
    xk = xk_ref[0]          # (TC, d)
    xv = xv_ref[0]          # (TC, d)
    # Unrolled head loop: weight slabs and output stores are indexed along the
    # leading (head) axis only -- no lane slicing, no concatenates.
    for h in range(n_heads):
        k_h = jnp.dot(xk, wk_ref[h], preferred_element_type=jnp.float32) + bk_ref[h]
        v_h = jnp.dot(xv, wv_ref[h], preferred_element_type=jnp.float32) + bv_ref[h]
        k_out_ref[0, h] = k_h.astype(k_out_ref.dtype)
        v_out_ref[0, h] = v_h.astype(v_out_ref.dtype)


# --------------------------------------------------------------------------- #
# Kernel 2: fused Q-projection + flash attention + head-merge/output-projection.
# Grid: (batch, q_tile, kv_tile, head); head innermost, kv reduction outside it.
# --------------------------------------------------------------------------- #
def _flash_attn_kernel(n_heads, approx_recip,
                       xq_ref, k_ref, v_ref, mask_ref,
                       wq_ref, bq_ref, wo_ref, bo_ref,
                       out_ref,
                       q_s, m_s, l_s, acc_s, oacc_s):
    j = pl.program_id(2)                 # kv-tile index
    h = pl.program_id(3)                 # head index (innermost)
    last_j = pl.num_programs(3 - 1) - 1  # == pl.num_programs(2) - 1
    last_h = n_heads - 1
    tq = q_s.shape[1]

    # First KV tile for this (batch, q-tile): project this head's Q from the
    # resident x_query tile and reset its online-softmax state.
    @pl.when(j == 0)
    def _init_head():
        q = jnp.dot(xq_ref[0], wq_ref[h],
                    preferred_element_type=jnp.float32) + bq_ref[h]
        q_s[h] = q.astype(q_s.dtype)
        m_s[h] = jnp.full((tq, 1), MASK_VALUE, jnp.float32)
        l_s[h] = jnp.zeros((tq, 1), jnp.float32)
        acc_s[h] = jnp.zeros(acc_s.shape[1:], jnp.float32)

    @pl.when(jnp.logical_and(j == 0, h == 0))
    def _init_out_acc():
        oacc_s[...] = jnp.zeros_like(oacc_s)

    k = k_ref[0, 0]                      # (TKV, hd), already scaled in wrapper
    v = v_ref[0, 0]                      # (TKV, hd)

    # Logits: contract head_dim of Q with head_dim of K directly (no explicit
    # transpose -> no XLU copy of K).
    s = lax.dot_general(q_s[h], k, (((1,), (1,)), ((), ())),
                        preferred_element_type=jnp.float32)
    s = s + jnp.where(mask_ref[0] != 0, 0.0, MASK_VALUE).astype(jnp.float32)

    # Online softmax update (fp32 throughout).
    m_prev = m_s[h]
    m_new = jnp.maximum(m_prev, jnp.max(s, axis=-1, keepdims=True))
    alpha = jnp.exp(m_prev - m_new)
    p = jnp.exp(s - m_new)
    l_s[h] = alpha * l_s[h] + jnp.sum(p, axis=-1, keepdims=True)
    acc_s[h] = alpha * acc_s[h] + jnp.dot(p.astype(v.dtype), v,
                                          preferred_element_type=jnp.float32)
    m_s[h] = m_new

    # Last KV tile: normalize this head and fold it straight through its Wo
    # slab into the shared (TQ, d) output accumulator (head merge == sum of
    # per-head matmuls -> no lane concatenate).
    @pl.when(j == last_j)
    def _finish_head():
        o_h = acc_s[h] * pl.reciprocal(l_s[h], approx=approx_recip)
        oacc_s[...] += jnp.dot(o_h.astype(wo_ref.dtype), wo_ref[h],
                               preferred_element_type=jnp.float32)

    @pl.when(jnp.logical_and(j == last_j, h == last_h))
    def _write_out():
        out_ref[0] = (oacc_s[...] + bo_ref[...]).astype(out_ref.dtype)


# --------------------------------------------------------------------------- #
# Wrapper
# --------------------------------------------------------------------------- #
def _pick_tile(dim, target, multiple):
    """Largest t <= target with dim % t == 0 and t % multiple == 0, else dim."""
    if dim <= target:
        return dim
    t = (target // multiple) * multiple
    while t >= multiple:
        if dim % t == 0:
            return t
        t -= multiple
    return dim


def _vmem_limit_bytes(required):
    try:
        cap = int(pltpu.get_tpu_info().vmem_capacity_bytes)
    except Exception:                       # noqa: BLE001 - conservative fallback
        cap = 64 * 1024 * 1024              # v7x-sized physical VMEM
    return int(min(max(2 * int(required), 32 * 1024 * 1024), int(0.9 * cap)))


def multi_head_attention(x_query_ncd, x_key_ncd, x_value_ncd, attention_mask_ncc,
                         params, *, n_heads, attention_logits_scale,
                         compute_dtype=jnp.float32,
                         q_tile=256, kv_tile=512, proj_tile=256):
    """Forward pass of MultiHeadAttention ('torch' backend, eval mode).

    q_tile/kv_tile defaults target v6e/v7x (256-row q tiles); drop q_tile to 128
    on v5e.  compute_dtype=jnp.bfloat16 enables bf16 MXU matmuls (fp32 accum).
    """
    n, c, d = x_query_ncd.shape
    assert d % n_heads == 0
    hd = d // n_heads
    out_dtype = x_query_ncd.dtype
    cds = jnp.dtype(compute_dtype).itemsize
    approx_recip = jnp.dtype(compute_dtype) != jnp.dtype(jnp.float32)

    # ---- one-time weight prep: head-major slabs, K pre-scaled ---------------
    scale = attention_logits_scale / hd

    def head_major_w(w):    # (d, d) -> (H, d, hd): split output columns by head
        return jnp.transpose(w.reshape(d, n_heads, hd), (1, 0, 2))

    def head_major_b(b):    # (1, d) -> (H, 1, hd)
        return jnp.transpose(b.reshape(1, n_heads, hd), (1, 0, 2)).astype(jnp.float32)

    wq_hm = head_major_w(params["wq"]).astype(compute_dtype)
    wk_hm = head_major_w(params["wk"] * scale).astype(compute_dtype)
    wv_hm = head_major_w(params["wv"]).astype(compute_dtype)
    wo_hm = params["wo"].reshape(n_heads, hd, d).astype(compute_dtype)  # rows by head
    bq_hm = head_major_b(params["bq"])
    bk_hm = head_major_b(params["bk"] * scale)
    bv_hm = head_major_b(params["bv"])
    bo = params["bo"].astype(jnp.float32)

    xq = x_query_ncd.astype(compute_dtype)
    xk = x_key_ncd.astype(compute_dtype)
    xv = x_value_ncd.astype(compute_dtype)
    mask_i8 = (attention_mask_ncc != 0).astype(jnp.int8)   # 4x less HBM than int32

    # Whole array resident in VMEM: single copy, no per-step double-buffering.
    vmem_space = pl.BlockSpec(memory_space=pltpu.MemorySpace.VMEM)

    # ---- Kernel 1: K/V projection into head-major (n, H, c, hd) -------------
    tc = _pick_tile(c, proj_tile, 8)
    act_spec = pl.BlockSpec((1, tc, d), lambda b, i: (b, i, 0))
    kv_out_spec = pl.BlockSpec((1, n_heads, tc, hd), lambda b, i: (b, 0, i, 0))
    kv_req = (2 * (2 * tc * d * cds)          # xk/xv tiles (double-buffered)
              + 2 * (2 * tc * d * cds)        # k/v output tiles
              + 2 * d * d * cds + 4 * d * 4)  # resident Wk/Wv + biases

    k_hm, v_hm = pl.pallas_call(
        functools.partial(_kv_proj_kernel, n_heads),
        out_shape=(jax.ShapeDtypeStruct((n, n_heads, c, hd), compute_dtype),
                   jax.ShapeDtypeStruct((n, n_heads, c, hd), compute_dtype)),
        grid_spec=pltpu.PrefetchScalarGridSpec(
            num_scalar_prefetch=0,
            grid=(n, c // tc),
            in_specs=[act_spec, act_spec,
                      vmem_space, vmem_space, vmem_space, vmem_space],
            out_specs=(kv_out_spec, kv_out_spec)),
        compiler_params=pltpu.CompilerParams(
            dimension_semantics=("parallel", "parallel"),
            vmem_limit_bytes=_vmem_limit_bytes(kv_req)),
    )(xk, xv, wk_hm, bk_hm, wv_hm, bv_hm)

    # ---- Kernel 2: fused Q-proj + flash attention + output projection -------
    tq = _pick_tile(c, q_tile, 32)    # 32: keeps int8 mask tiles sublane-aligned
    tkv = _pick_tile(c, kv_tile, 128)
    grid = (n, c // tq, c // tkv, n_heads)
    attn_req = (2 * (tq * d * cds                # x_query tile
                     + 2 * tkv * hd * cds        # K and V tiles
                     + tq * tkv                  # int8 mask tile
                     + tq * d * 4)               # output tile (out_dtype<=4B)
                + 2 * d * d * cds + 4 * d * 4    # resident Wq/Wo + biases
                + tq * d * cds + 2 * tq * d * 4  # q / acc / fused-output scratch
                + 4 * tq * tkv * 4)              # fp32 logits working set

    out = pl.pallas_call(
        functools.partial(_flash_attn_kernel, n_heads, approx_recip),
        out_shape=jax.ShapeDtypeStruct((n, c, d), out_dtype),
        grid_spec=pltpu.PrefetchScalarGridSpec(
            num_scalar_prefetch=0,
            grid=grid,
            in_specs=[
                pl.BlockSpec((1, tq, d), lambda b, i, j, h: (b, i, 0)),          # x_query
                pl.BlockSpec((1, 1, tkv, hd), lambda b, i, j, h: (b, h, j, 0)),  # K (head-major)
                pl.BlockSpec((1, 1, tkv, hd), lambda b, i, j, h: (b, h, j, 0)),  # V (head-major)
                pl.BlockSpec((1, tq, tkv), lambda b, i, j, h: (b, i, j)),        # int8 mask
                vmem_space, vmem_space, vmem_space, vmem_space,                  # Wq, bq, Wo, bo
            ],
            out_specs=pl.BlockSpec((1, tq, d), lambda b, i, j, h: (b, i, 0)),
            scratch_shapes=[
                pltpu.VMEM((n_heads, tq, hd), compute_dtype),  # projected Q per head
                pltpu.VMEM((n_heads, tq, 1), jnp.float32),     # running max
                pltpu.VMEM((n_heads, tq, 1), jnp.float32),     # running denom
                pltpu.VMEM((n_heads, tq, hd), jnp.float32),    # per-head numerator
                pltpu.VMEM((tq, d), jnp.float32),              # fused output accumulator
            ]),
        compiler_params=pltpu.CompilerParams(
            dimension_semantics=("parallel", "parallel", "arbitrary", "arbitrary"),
            vmem_limit_bytes=_vmem_limit_bytes(attn_req)),
    )(xq, k_hm, v_hm, mask_i8, wq_hm, bq_hm, wo_hm, bo)

    return out


# --------------------------------------------------------------------------- #
# Plain-JAX reference mirroring the PyTorch 'torch' backend (eval mode).
# --------------------------------------------------------------------------- #
def multi_head_attention_ref(xq, xk, xv, mask, params, *, n_heads,
                             attention_logits_scale):
    n, c, d = xq.shape
    k_dim = d // n_heads

    def proj(x, w, b):
        return x @ w + b

    def split(x):  # (n, c, d) -> (n, h, c, k)
        return x.reshape(n, c, n_heads, k_dim).transpose(0, 2, 1, 3)

    q = split(proj(xq, params["wq"], params["bq"]))
    k = split(proj(xk, params["wk"], params["bk"]))
    v = split(proj(xv, params["wv"], params["bv"]))

    scale = attention_logits_scale / k_dim
    k = k * scale
    logits = jnp.einsum("nhqk,nhck->nhqc", q, k)
    bias = jnp.where(mask != 0, 0.0, -jnp.inf)[:, None, :, :]
    logits = logits + bias
    w = jax.nn.softmax(logits.astype(jnp.float32), axis=-1)
    out = jnp.einsum("nhqc,nhck->nhqk", w, v)
    out = out.transpose(0, 2, 1, 3).reshape(n, c, d)
    return out @ params["wo"] + params["bo"]


if __name__ == "__main__":
    n, c, d, n_heads = 2, 8, 32, 4
    attention_logits_scale = 2.0

    key = jax.random.PRNGKey(0)
    ks = jax.random.split(key, 12)

    init_std = 0.02
    params = {
        "wq": init_std * jax.random.normal(ks[0], (d, d), jnp.float32),
        "wk": init_std * jax.random.normal(ks[1], (d, d), jnp.float32),
        "wv": init_std * jax.random.normal(ks[2], (d, d), jnp.float32),
        "wo": init_std * jax.random.normal(ks[3], (d, d), jnp.float32),
        # Non-zero biases to exercise all bias paths in the kernel.
        "bq": 0.01 * jax.random.normal(ks[8], (1, d), jnp.float32),
        "bk": 0.01 * jax.random.normal(ks[9], (1, d), jnp.float32),
        "bv": 0.01 * jax.random.normal(ks[10], (1, d), jnp.float32),
        "bo": 0.01 * jax.random.normal(ks[11], (1, d), jnp.float32),
    }

    x_query = jax.random.normal(ks[4], (n, c, d), jnp.float32)
    x_key = jax.random.normal(ks[5], (n, c, d), jnp.float32)
    x_value = jax.random.normal(ks[6], (n, c, d), jnp.float32)

    # Boolean attention mask (True = attend); force the diagonal so no row is
    # fully masked (fully-masked rows are NaN in the torch reference).
    rand_mask = jax.random.uniform(ks[7], (n, c, c)) > 0.3
    eye = jnp.eye(c, dtype=bool)[None]
    attention_mask = rand_mask | eye

    mha = functools.partial(multi_head_attention,
                            n_heads=n_heads,
                            attention_logits_scale=attention_logits_scale)

    out_f32 = jax.block_until_ready(
        mha(x_query, x_key, x_value, attention_mask, params))
    ref = multi_head_attention_ref(
        x_query, x_key, x_value, attention_mask, params,
        n_heads=n_heads, attention_logits_scale=attention_logits_scale)

    assert out_f32.shape == (n, c, d)
    assert jnp.allclose(out_f32, ref, atol=2e-5, rtol=1e-4), \
        "fp32 kernel mismatch vs JAX reference"

    # bf16 MXU path (fp32 accumulation + fp32 softmax), looser tolerance.
    out_bf16 = jax.block_until_ready(
        mha(x_query, x_key, x_value, attention_mask, params,
            compute_dtype=jnp.bfloat16))
    assert out_bf16.dtype == jnp.float32
    assert jnp.allclose(out_bf16, ref, atol=5e-3), \
        "bf16 kernel mismatch vs JAX reference"

    print("KERNEL_OK")
</pallas_src>

<mosaic_0001>
module attributes {stable_mosaic.version = 11 : i64} {
  func.func @_kv_proj_kernel(%arg0: i32, %arg1: i32, %arg2: memref<1x8x32xf32, #tpu.memory_space<vmem>>, %arg3: memref<1x8x32xf32, #tpu.memory_space<vmem>>, %arg4: memref<4x32x8xf32, #tpu.memory_space<vmem>>, %arg5: memref<4x1x8xf32, #tpu.memory_space<vmem>>, %arg6: memref<4x32x8xf32, #tpu.memory_space<vmem>>, %arg7: memref<4x1x8xf32, #tpu.memory_space<vmem>>, %arg8: memref<1x4x8x8xf32, #tpu.memory_space<vmem>>, %arg9: memref<1x4x8x8xf32, #tpu.memory_space<vmem>>) attributes {dimension_semantics = [#tpu.dimension_semantics<parallel>, #tpu.dimension_semantics<parallel>], iteration_bounds = array<i64: 2, 1>, scalar_prefetch = 0 : i64, scratch_operands = 0 : i64, tpu.core_type = #tpu.core_type<tc>, window_params = [{transform_indices = @transform_0, window_bounds = array<i64: 1, 8, 32>}, {transform_indices = @transform_1, window_bounds = array<i64: 1, 8, 32>}, {pipeline_mode = #tpu.pipeline_mode<synchronous>, transform_indices = @transform_2, window_bounds = array<i64: 4, 32, 8>}, {pipeline_mode = #tpu.pipeline_mode<synchronous>, transform_indices = @transform_3, window_bounds = array<i64: 4, 1, 8>}, {pipeline_mode = #tpu.pipeline_mode<synchronous>, transform_indices = @transform_4, window_bounds = array<i64: 4, 32, 8>}, {pipeline_mode = #tpu.pipeline_mode<synchronous>, transform_indices = @transform_5, window_bounds = array<i64: 4, 1, 8>}, {transform_indices = @transform_6, window_bounds = array<i64: 1, 4, 8, 8>}, {transform_indices = @transform_7, window_bounds = array<i64: 1, 4, 8, 8>}]} {
    %c0 = arith.constant 0 : index
    %c0_0 = arith.constant 0 : index
    %c0_1 = arith.constant 0 : index
    %0 = vector.load %arg2[%c0, %c0_0, %c0_1] : memref<1x8x32xf32, #tpu.memory_space<vmem>>, vector<1x8x32xf32>
    %1 = vector.shape_cast %0 : vector<1x8x32xf32> to vector<8x32xf32>
    %c0_2 = arith.constant 0 : index
    %c0_3 = arith.constant 0 : index
    %c0_4 = arith.constant 0 : index
    %2 = vector.load %arg3[%c0_2, %c0_3, %c0_4] : memref<1x8x32xf32, #tpu.memory_space<vmem>>, vector<1x8x32xf32>
    %3 = vector.shape_cast %2 : vector<1x8x32xf32> to vector<8x32xf32>
    %c0_5 = arith.constant 0 : index
    %c0_6 = arith.constant 0 : index
    %c0_7 = arith.constant 0 : index
    %4 = vector.load %arg4[%c0_5, %c0_6, %c0_7] : memref<4x32x8xf32, #tpu.memory_space<vmem>>, vector<1x32x8xf32>
    %5 = vector.shape_cast %4 : vector<1x32x8xf32> to vector<32x8xf32>
    %cst = arith.constant dense<0.000000e+00> : vector<8x8xf32>
    %6 = tpu.matmul %1, %5, %cst {dimension_numbers = #tpu.dot_dimension_numbers<[1], [0], [0], [1], [0, 0, 1, 1], [], []>} : vector<8x32xf32>, vector<32x8xf32>, vector<8x8xf32> -> vector<8x8xf32>
    %c0_8 = arith.constant 0 : index
    %c0_9 = arith.constant 0 : index
    %c0_10 = arith.constant 0 : index
    %7 = vector.load %arg5[%c0_8, %c0_9, %c0_10] : memref<4x1x8xf32, #tpu.memory_space<vmem>>, vector<1x1x8xf32>
    %8 = vector.shape_cast %7 : vector<1x1x8xf32> to vector<1x8xf32>
    %9 = vector.broadcast %8 : vector<1x8xf32> to vector<8x8xf32>
    %10 = arith.addf %6, %9 : vector<8x8xf32>
    %c0_11 = arith.constant 0 : index
    %c0_12 = arith.constant 0 : index
    %c0_13 = arith.constant 0 : index
    %11 = vector.load %arg6[%c0_11, %c0_12, %c0_13] : memref<4x32x8xf32, #tpu.memory_space<vmem>>, vector<1x32x8xf32>
    %12 = vector.shape_cast %11 : vector<1x32x8xf32> to vector<32x8xf32>
    %cst_14 = arith.constant dense<0.000000e+00> : vector<8x8xf32>
    %13 = tpu.matmul %3, %12, %cst_14 {dimension_numbers = #tpu.dot_dimension_numbers<[1], [0], [0], [1], [0, 0, 1, 1], [], []>} : vector<8x32xf32>, vector<32x8xf32>, vector<8x8xf32> -> vector<8x8xf32>
    %c0_15 = arith.constant 0 : index
    %c0_16 = arith.constant 0 : index
    %c0_17 = arith.constant 0 : index
    %14 = vector.load %arg7[%c0_15, %c0_16, %c0_17] : memref<4x1x8xf32, #tpu.memory_space<vmem>>, vector<1x1x8xf32>
    %15 = vector.shape_cast %14 : vector<1x1x8xf32> to vector<1x8xf32>
    %16 = vector.broadcast %15 : vector<1x8xf32> to vector<8x8xf32>
    %17 = arith.addf %13, %16 : vector<8x8xf32>
    %c0_18 = arith.constant 0 : index
    %c0_19 = arith.constant 0 : index
    %c0_20 = arith.constant 0 : index
    %c0_21 = arith.constant 0 : index
    %18 = vector.load %arg8[%c0_18, %c0_19, %c0_20, %c0_21] : memref<1x4x8x8xf32, #tpu.memory_space<vmem>>, vector<1x1x8x8xf32>
    %19 = vector.shape_cast %18 : vector<1x1x8x8xf32> to vector<8x8xf32>
    %20 = vector.shape_cast %10 : vector<8x8xf32> to vector<1x1x8x8xf32>
    tpu.vector_store %arg8[%c0_18, %c0_19, %c0_20, %c0_21], %20 {strides = array<i32>} : memref<1x4x8x8xf32, #tpu.memory_space<vmem>>, vector<1x1x8x8xf32>,
    %c0_22 = arith.constant 0 : index
    %c0_23 = arith.constant 0 : index
    %c0_24 = arith.constant 0 : index
    %c0_25 = arith.constant 0 : index
    %21 = vector.load %arg9[%c0_22, %c0_23, %c0_24, %c0_25] : memref<1x4x8x8xf32, #tpu.memory_space<vmem>>, vector<1x1x8x8xf32>
    %22 = vector.shape_cast %21 : vector<1x1x8x8xf32> to vector<8x8xf32>
    %23 = vector.shape_cast %17 : vector<8x8xf32> to vector<1x1x8x8xf32>
    tpu.vector_store %arg9[%c0_22, %c0_23, %c0_24, %c0_25], %23 {strides = array<i32>} : memref<1x4x8x8xf32, #tpu.memory_space<vmem>>, vector<1x1x8x8xf32>,
    %c1 = arith.constant 1 : index
    %c0_26 = arith.constant 0 : index
    %c0_27 = arith.constant 0 : index
    %24 = vector.load %arg4[%c1, %c0_26, %c0_27] : memref<4x32x8xf32, #tpu.memory_space<vmem>>, vector<1x32x8xf32>
    %25 = vector.shape_cast %24 : vector<1x32x8xf32> to vector<32x8xf32>
    %cst_28 = arith.constant dense<0.000000e+00> : vector<8x8xf32>
    %26 = tpu.matmul %1, %25, %cst_28 {dimension_numbers = #tpu.dot_dimension_numbers<[1], [0], [0], [1], [0, 0, 1, 1], [], []>} : vector<8x32xf32>, vector<32x8xf32>, vector<8x8xf32> -> vector<8x8xf32>
    %c1_29 = arith.constant 1 : index
    %c0_30 = arith.constant 0 : index
    %c0_31 = arith.constant 0 : index
    %27 = vector.load %arg5[%c1_29, %c0_30, %c0_31] : memref<4x1x8xf32, #tpu.memory_space<vmem>>, vector<1x1x8xf32>
    %28 = vector.shape_cast %27 : vector<1x1x8xf32> to vector<1x8xf32>
    %29 = vector.broadcast %28 : vector<1x8xf32> to vector<8x8xf32>
    %30 = arith.addf %26, %29 : vector<8x8xf32>
    %c1_32 = arith.constant 1 : index
    %c0_33 = arith.constant 0 : index
    %c0_34 = arith.constant 0 : index
    %31 = vector.load %arg6[%c1_32, %c0_33, %c0_34] : memref<4x32x8xf32, #tpu.memory_space<vmem>>, vector<1x32x8xf32>
    %32 = vector.shape_cast %31 : vector<1x32x8xf32> to vector<32x8xf32>
    %cst_35 = arith.constant dense<0.000000e+00> : vector<8x8xf32>
    %33 = tpu.matmul %3, %32, %cst_35 {dimension_numbers = #tpu.dot_dimension_numbers<[1], [0], [0], [1], [0, 0, 1, 1], [], []>} : vector<8x32xf32>, vector<32x8xf32>, vector<8x8xf32> -> vector<8x8xf32>
    %c1_36 = arith.constant 1 : index
    %c0_37 = arith.constant 0 : index
    %c0_38 = arith.constant 0 : index
    %34 = vector.load %arg7[%c1_36, %c0_37, %c0_38] : memref<4x1x8xf32, #tpu.memory_space<vmem>>, vector<1x1x8xf32>
    %35 = vector.shape_cast %34 : vector<1x1x8xf32> to vector<1x8xf32>
    %36 = vector.broadcast %35 : vector<1x8xf32> to vector<8x8xf32>
    %37 = arith.addf %33, %36 : vector<8x8xf32>
    %c0_39 = arith.constant 0 : index
    %c1_40 = arith.constant 1 : index
    %c0_41 = arith.constant 0 : index
    %c0_42 = arith.constant 0 : index
    %38 = vector.load %arg8[%c0_39, %c1_40, %c0_41, %c0_42] : memref<1x4x8x8xf32, #tpu.memory_space<vmem>>, vector<1x1x8x8xf32>
    %39 = vector.shape_cast %38 : vector<1x1x8x8xf32> to vector<8x8xf32>
    %40 = vector.shape_cast %30 : vector<8x8xf32> to vector<1x1x8x8xf32>
    tpu.vector_store %arg8[%c0_39, %c1_40, %c0_41, %c0_42], %40 {strides = array<i32>} : memref<1x4x8x8xf32, #tpu.memory_space<vmem>>, vector<1x1x8x8xf32>,
    %c0_43 = arith.constant 0 : index
    %c1_44 = arith.constant 1 : index
    %c0_45 = arith.constant 0 : index
    %c0_46 = arith.constant 0 : index
    %41 = vector.load %arg9[%c0_43, %c1_44, %c0_45, %c0_46] : memref<1x4x8x8xf32, #tpu.memory_space<vmem>>, vector<1x1x8x8xf32>
    %42 = vector.shape_cast %41 : vector<1x1x8x8xf32> to vector<8x8xf32>
    %43 = vector.shape_cast %37 : vector<8x8xf32> to vector<1x1x8x8xf32>
    tpu.vector_store %arg9[%c0_43, %c1_44, %c0_45, %c0_46], %43 {strides = array<i32>} : memref<1x4x8x8xf32, #tpu.memory_space<vmem>>, vector<1x1x8x8xf32>,
    %c2 = arith.constant 2 : index
    %c0_47 = arith.constant 0 : index
    %c0_48 = arith.constant 0 : index
    %44 = vector.load %arg4[%c2, %c0_47, %c0_48] : memref<4x32x8xf32, #tpu.memory_space<vmem>>, vector<1x32x8xf32>
    %45 = vector.shape_cast %44 : vector<1x32x8xf32> to vector<32x8xf32>
    %cst_49 = arith.constant dense<0.000000e+00> : vector<8x8xf32>
    %46 = tpu.matmul %1, %45, %cst_49 {dimension_numbers = #tpu.dot_dimension_numbers<[1], [0], [0], [1], [0, 0, 1, 1], [], []>} : vector<8x32xf32>, vector<32x8xf32>, vector<8x8xf32> -> vector<8x8xf32>
    %c2_50 = arith.constant 2 : index
    %c0_51 = arith.constant 0 : index
    %c0_52 = arith.constant 0 : index
    %47 = vector.load %arg5[%c2_50, %c0_51, %c0_52] : memref<4x1x8xf32, #tpu.memory_space<vmem>>, vector<1x1x8xf32>
    %48 = vector.shape_cast %47 : vector<1x1x8xf32> to vector<1x8xf32>
    %49 = vector.broadcast %48 : vector<1x8xf32> to vector<8x8xf32>
    %50 = arith.addf %46, %49 : vector<8x8xf32>
    %c2_53 = arith.constant 2 : index
    %c0_54 = arith.constant 0 : index
    %c0_55 = arith.constant 0 : index
    %51 = vector.load %arg6[%c2_53, %c0_54, %c0_55] : memref<4x32x8xf32, #tpu.memory_space<vmem>>, vector<1x32x8xf32>
    %52 = vector.shape_cast %51 : vector<1x32x8xf32> to vector<32x8xf32>
    %cst_56 = arith.constant dense<0.000000e+00> : vector<8x8xf32>
    %53 = tpu.matmul %3, %52, %cst_56 {dimension_numbers = #tpu.dot_dimension_numbers<[1], [0], [0], [1], [0, 0, 1, 1], [], []>} : vector<8x32xf32>, vector<32x8xf32>, vector<8x8xf32> -> vector<8x8xf32>
    %c2_57 = arith.constant 2 : index
    %c0_58 = arith.constant 0 : index
    %c0_59 = arith.constant 0 : index
    %54 = vector.load %arg7[%c2_57, %c0_58, %c0_59] : memref<4x1x8xf32, #tpu.memory_space<vmem>>, vector<1x1x8xf32>
    %55 = vector.shape_cast %54 : vector<1x1x8xf32> to vector<1x8xf32>
    %56 = vector.broadcast %55 : vector<1x8xf32> to vector<8x8xf32>
    %57 = arith.addf %53, %56 : vector<8x8xf32>
    %c0_60 = arith.constant 0 : index
    %c2_61 = arith.constant 2 : index
    %c0_62 = arith.constant 0 : index
    %c0_63 = arith.constant 0 : index
    %58 = vector.load %arg8[%c0_60, %c2_61, %c0_62, %c0_63] : memref<1x4x8x8xf32, #tpu.memory_space<vmem>>, vector<1x1x8x8xf32>
    %59 = vector.shape_cast %58 : vector<1x1x8x8xf32> to vector<8x8xf32>
    %60 = vector.shape_cast %50 : vector<8x8xf32> to vector<1x1x8x8xf32>
    tpu.vector_store %arg8[%c0_60, %c2_61, %c0_62, %c0_63], %60 {strides = array<i32>} : memref<1x4x8x8xf32, #tpu.memory_space<vmem>>, vector<1x1x8x8xf32>,
    %c0_64 = arith.constant 0 : index
    %c2_65 = arith.constant 2 : index
    %c0_66 = arith.constant 0 : index
    %c0_67 = arith.constant 0 : index
    %61 = vector.load %arg9[%c0_64, %c2_65, %c0_66, %c0_67] : memref<1x4x8x8xf32, #tpu.memory_space<vmem>>, vector<1x1x8x8xf32>
    %62 = vector.shape_cast %61 : vector<1x1x8x8xf32> to vector<8x8xf32>
    %63 = vector.shape_cast %57 : vector<8x8xf32> to vector<1x1x8x8xf32>
    tpu.vector_store %arg9[%c0_64, %c2_65, %c0_66, %c0_67], %63 {strides = array<i32>} : memref<1x4x8x8xf32, #tpu.memory_space<vmem>>, vector<1x1x8x8xf32>,
    %c3 = arith.constant 3 : index
    %c0_68 = arith.constant 0 : index
    %c0_69 = arith.constant 0 : index
    %64 = vector.load %arg4[%c3, %c0_68, %c0_69] : memref<4x32x8xf32, #tpu.memory_space<vmem>>, vector<1x32x8xf32>
    %65 = vector.shape_cast %64 : vector<1x32x8xf32> to vector<32x8xf32>
    %cst_70 = arith.constant dense<0.000000e+00> : vector<8x8xf32>
    %66 = tpu.matmul %1, %65, %cst_70 {dimension_numbers = #tpu.dot_dimension_numbers<[1], [0], [0], [1], [0, 0, 1, 1], [], []>} : vector<8x32xf32>, vector<32x8xf32>, vector<8x8xf32> -> vector<8x8xf32>
    %c3_71 = arith.constant 3 : index
    %c0_72 = arith.constant 0 : index
    %c0_73 = arith.constant 0 : index
    %67 = vector.load %arg5[%c3_71, %c0_72, %c0_73] : memref<4x1x8xf32, #tpu.memory_space<vmem>>, vector<1x1x8xf32>
    %68 = vector.shape_cast %67 : vector<1x1x8xf32> to vector<1x8xf32>
    %69 = vector.broadcast %68 : vector<1x8xf32> to vector<8x8xf32>
    %70 = arith.addf %66, %69 : vector<8x8xf32>
    %c3_74 = arith.constant 3 : index
    %c0_75 = arith.constant 0 : index
    %c0_76 = arith.constant 0 : index
    %71 = vector.load %arg6[%c3_74, %c0_75, %c0_76] : memref<4x32x8xf32, #tpu.memory_space<vmem>>, vector<1x32x8xf32>
    %72 = vector.shape_cast %71 : vector<1x32x8xf32> to vector<32x8xf32>
    %cst_77 = arith.constant dense<0.000000e+00> : vector<8x8xf32>
    %73 = tpu.matmul %3, %72, %cst_77 {dimension_numbers = #tpu.dot_dimension_numbers<[1], [0], [0], [1], [0, 0, 1, 1], [], []>} : vector<8x32xf32>, vector<32x8xf32>, vector<8x8xf32> -> vector<8x8xf32>
    %c3_78 = arith.constant 3 : index
    %c0_79 = arith.constant 0 : index
    %c0_80 = arith.constant 0 : index
    %74 = vector.load %arg7[%c3_78, %c0_79, %c0_80] : memref<4x1x8xf32, #tpu.memory_space<vmem>>, vector<1x1x8xf32>
    %75 = vector.shape_cast %74 : vector<1x1x8xf32> to vector<1x8xf32>
    %76 = vector.broadcast %75 : vector<1x8xf32> to vector<8x8xf32>
    %77 = arith.addf %73, %76 : vector<8x8xf32>
    %c0_81 = arith.constant 0 : index
    %c3_82 = arith.constant 3 : index
    %c0_83 = arith.constant 0 : index
    %c0_84 = arith.constant 0 : index
    %78 = vector.load %arg8[%c0_81, %c3_82, %c0_83, %c0_84] : memref<1x4x8x8xf32, #tpu.memory_space<vmem>>, vector<1x1x8x8xf32>
    %79 = vector.shape_cast %78 : vector<1x1x8x8xf32> to vector<8x8xf32>
    %80 = vector.shape_cast %70 : vector<8x8xf32> to vector<1x1x8x8xf32>
    tpu.vector_store %arg8[%c0_81, %c3_82, %c0_83, %c0_84], %80 {strides = array<i32>} : memref<1x4x8x8xf32, #tpu.memory_space<vmem>>, vector<1x1x8x8xf32>,
    %c0_85 = arith.constant 0 : index
    %c3_86 = arith.constant 3 : index
    %c0_87 = arith.constant 0 : index
    %c0_88 = arith.constant 0 : index
    %81 = vector.load %arg9[%c0_85, %c3_86, %c0_87, %c0_88] : memref<1x4x8x8xf32, #tpu.memory_space<vmem>>, vector<1x1x8x8xf32>
    %82 = vector.shape_cast %81 : vector<1x1x8x8xf32> to vector<8x8xf32>
    %83 = vector.shape_cast %77 : vector<8x8xf32> to vector<1x1x8x8xf32>
    tpu.vector_store %arg9[%c0_85, %c3_86, %c0_87, %c0_88], %83 {strides = array<i32>} : memref<1x4x8x8xf32, #tpu.memory_space<vmem>>, vector<1x1x8x8xf32>,
    return
  }
  func.func @transform_0(%arg0: i32, %arg1: i32) -> (i32, i32, i32) {
    %c0_i32 = arith.constant 0 : i32
    %c0_i32_0 = arith.constant 0 : i32
    return %arg0, %arg1, %c0_i32 : i32, i32, i32
  }
  func.func @transform_1(%arg0: i32, %arg1: i32) -> (i32, i32, i32) {
    %c0_i32 = arith.constant 0 : i32
    %c0_i32_0 = arith.constant 0 : i32
    return %arg0, %arg1, %c0_i32 : i32, i32, i32
  }
  func.func @transform_2(%arg0: i32, %arg1: i32) -> (i32, i32, i32) {
    %c0_i32 = arith.constant 0 : i32
    %c0_i32_0 = arith.constant 0 : i32
    %c0_i32_1 = arith.constant 0 : i32
    %c0_i32_2 = arith.constant 0 : i32
    return %c0_i32, %c0_i32_0, %c0_i32_1 : i32, i32, i32
  }
  func.func @transform_3(%arg0: i32, %arg1: i32) -> (i32, i32, i32) {
    %c0_i32 = arith.constant 0 : i32
    %c0_i32_0 = arith.constant 0 : i32
    %c0_i32_1 = arith.constant 0 : i32
    %c0_i32_2 = arith.constant 0 : i32
    return %c0_i32, %c0_i32_0, %c0_i32_1 : i32, i32, i32
  }
  func.func @transform_4(%arg0: i32, %arg1: i32) -> (i32, i32, i32) {
    %c0_i32 = arith.constant 0 : i32
    %c0_i32_0 = arith.constant 0 : i32
    %c0_i32_1 = arith.constant 0 : i32
    %c0_i32_2 = arith.constant 0 : i32
    return %c0_i32, %c0_i32_0, %c0_i32_1 : i32, i32, i32
  }
  func.func @transform_5(%arg0: i32, %arg1: i32) -> (i32, i32, i32) {
    %c0_i32 = arith.constant 0 : i32
    %c0_i32_0 = arith.constant 0 : i32
    %c0_i32_1 = arith.constant 0 : i32
    %c0_i32_2 = arith.constant 0 : i32
    return %c0_i32, %c0_i32_0, %c0_i32_1 : i32, i32, i32
  }
  func.func @transform_6(%arg0: i32, %arg1: i32) -> (i32, i32, i32, i32) {
    %c0_i32 = arith.constant 0 : i32
    %c0_i32_0 = arith.constant 0 : i32
    %c0_i32_1 = arith.constant 0 : i32
    return %arg0, %c0_i32, %arg1, %c0_i32_0 : i32, i32, i32, i32
  }
  func.func @transform_7(%arg0: i32, %arg1: i32) -> (i32, i32, i32, i32) {
    %c0_i32 = arith.constant 0 : i32
    %c0_i32_0 = arith.constant 0 : i32
    %c0_i32_1 = arith.constant 0 : i32
    return %arg0, %c0_i32, %arg1, %c0_i32_0 : i32, i32, i32, i32
  }
}

</mosaic_0001>

<llo_original>
// kernel: tpu_custom_call.1
$region0: #{tpu_custom_call.1}
  #allocation0 [shape = 'u32[]', space=smem, size = 0x4, offset = 0x4, fixed_abs, tag = 'smem constant byte address 0x4 - core index']
  #allocation1 [shape = 'u32[144,128]{1,0:T(1,128)}', space=vmem, size = 0x12000, scoped, tag = 'internal scratch']
  %s0 = inlined_call_operand.vmem [shape: f32[2,8,32], index: 0, kind: input, shape index: {}]
  %s1 = inlined_call_operand.vmem [shape: f32[2,8,32], index: 1, kind: input, shape index: {}]
  %s2 = inlined_call_operand.vmem [shape: f32[4,32,8], index: 2, kind: input, shape index: {}]
  %s3 = inlined_call_operand.vmem [shape: f32[4,1,8], index: 3, kind: input, shape index: {}]
  %s4 = inlined_call_operand.vmem [shape: f32[4,32,8], index: 4, kind: input, shape index: {}]
  %s5 = inlined_call_operand.vmem [shape: f32[4,1,8], index: 5, kind: input, shape index: {}]
  %s6 = inlined_call_operand.hbm [shape: f32[2,4,8,8], index: 6, kind: output, shape index: {0}]
  %s7 = inlined_call_operand.hbm [shape: f32[2,4,8,8], index: 7, kind: output, shape index: {1}]
  %8 = xla_tuple %s6, %s7
  %s9 = sld [smem:[#allocation0]]
  $region65: #{tpu_custom_call.1} parent=0
    _
  %s11 = ssub.s32 1, %s9
  %s12 = scalar_select 0, %s11, %s9
  $region1: #{tpu_custom_call.1} parent=0
    #allocation2 [shape = 'u8[32768]{0}', space=vmem, size = 0x8000, scoped, tag = 'output window, operand 0']
    #allocation3 [shape = 's32[2]{0}', space=sflag, size = 0x8, scoped, tag = 'scoped memory for tpu_custom_call.1']
    #allocation4 [shape = 'u8[32768]{0}', space=vmem, size = 0x8000, scoped, tag = 'output window, operand 1']
    #allocation5 [shape = 's32[2]{0}', space=sflag, size = 0x8, scoped, tag = 'scoped memory for tpu_custom_call.1']
    %13 = vsyncpa [#allocation3], 0
    %s14 = scalar_lea.sflag [#allocation3], 1
    %15 = vsyncpa %s14, 0
    %16 = vsyncpa [#allocation5], 0
    %s17 = scalar_lea.sflag [#allocation5], 1
    %18 = vsyncpa %s17, 0
    loop: start=0, step=1, limit=4
    $region2: #{tpu_custom_call.1} parent=1 // loop_pre_header
      _
    $region3: #{tpu_custom_call.1} parent=1 // loop_header
      %s20 = sphi 0, %s24
      %p21 = scmp.ge.s32.totalorder %s20, 4
      %s27 = sphi 0, %s39
      %s28 = sphi 0, %s35
      %s29 = sphi 0, %s27
      %s30 = sphi 0, %s28
      %s31 = sphi 0, %s29
      %s32 = sphi 0, %s30
      %s44 = sphi 0, %s46
      %s47 = sphi 0, %s44
      %s48 = sphi 0, %s47
      %s64 = sphi 0, %s48
      %s72 = sphi 0, %s74
      %s75 = sphi 0, %s72
      %s76 = sphi 0, %s75
      %s92 = sphi 0, %s76
      %s96 = sphi 0, %s96
      %s98 = sphi 0, %s96
      %s99 = sphi 0, %s98
      %s113 = sphi 0, %s99
      %s117 = sphi 0, %s117
      %s119 = sphi 0, %s117
      %s120 = sphi 0, %s119
      %s134 = sphi 0, %s120
      %s138 = sphi 0, %s138
      %s140 = sphi 0, %s138
      %s141 = sphi 0, %s140
      %s155 = sphi 0, %s141
      %s159 = sphi 0, %s159
      %s161 = sphi 0, %s159
      %s162 = sphi 0, %s161
      %s176 = sphi 0, %s162
      %s184 = sphi 0, %s186
      %s187 = sphi 0, %s184
      %s188 = sphi 0, %s187
      %s204 = sphi 0, %s188
      %s212 = sphi 0, %s214
      %s215 = sphi 0, %s212
      %s216 = sphi 0, %s215
      %s232 = sphi 0, %s216
    $region4: #{tpu_custom_call.1} parent=1 // loop_header_branch
      %23 = sbr.rel (%p21) target = $region8
    $region5: #{tpu_custom_call.1} parent=1 // loop_body
      %s25 = ssub.s32 %s20, 1
      %s26 = ssub.s32 %s20, 2
      %s33 = sadd.s32 1, %s28
      %p34 = scmp.ge.s32.totalorder %s33, 1
      %s35 = scalar_select %p34, 0, %s33
      %s36 = sadd.s32 1, %s27
      %s37 = scalar_select %p34, %s36, %s27
      %p38 = scmp.ge.s32.totalorder %s37, 2
      %s39 = scalar_select %p38, 0, %s37
      %s40 = ssub.s32 %s27, %s39
      %s41 = ssub.s32 %s28, %s35
      %s42 = sor.u32 %s40, %s41
      %p43 = scmp.eq.s32.totalorder %s42, 0
      %s45 = sadd.s32 %s44, 1
      %s46 = scalar_select %p43, %s44, %s45
      %p49 = pneg %p43
      %p50 = scmp.eq.s32.totalorder %s20, 1
      %p51 = por %p49, %p50
      %p52 = scmp.ne.s32.totalorder %s44, %s47
      %p53 = scmp.eq.s32.totalorder %s20, 0
      %p54 = por %p52, %p53
      %p55 = scmp.ne.s32.totalorder %s44, %s47
      %p56 = scmp.eq.s32.totalorder %s25, 1
      %p57 = por %p55, %p56
      %p58 = scmp.ne.s32.totalorder %s47, %s48
      %p59 = scmp.eq.s32.totalorder %s25, 0
      %p60 = por %p58, %p59
      %p61 = scmp.ne.s32.totalorder %s47, %s48
      %p62 = scmp.eq.s32.totalorder %s26, 1
      %p63 = por %p61, %p62
      %p65 = scmp.ne.s32.totalorder %s48, %s64
      %p66 = scmp.eq.s32.totalorder %s26, 0
      %p67 = por %p65, %p66
      %s68 = ssub.s32 %s27, %s39
      %s69 = ssub.s32 %s28, %s35
      %s70 = sor.u32 %s68, %s69
      %p71 = scmp.eq.s32.totalorder %s70, 0
      %s73 = sadd.s32 %s72, 1
      %s74 = scalar_select %p71, %s72, %s73
      %p77 = pneg %p71
      %p78 = scmp.eq.s32.totalorder %s20, 1
      %p79 = por %p77, %p78
      %p80 = scmp.ne.s32.totalorder %s72, %s75
      %p81 = scmp.eq.s32.totalorder %s20, 0
      %p82 = por %p80, %p81
      %p83 = scmp.ne.s32.totalorder %s72, %s75
      %p84 = scmp.eq.s32.totalorder %s25, 1
      %p85 = por %p83, %p84
      %p86 = scmp.ne.s32.totalorder %s75, %s76
      %p87 = scmp.eq.s32.totalorder %s25, 0
      %p88 = por %p86, %p87
      %p89 = scmp.ne.s32.totalorder %s75, %s76
      %p90 = scmp.eq.s32.totalorder %s26, 1
      %p91 = por %p89, %p90
      %p93 = scmp.ne.s32.totalorder %s76, %s92
      %p94 = scmp.eq.s32.totalorder %s26, 0
      %p95 = por %p93, %p94
      %s97 = sadd.s32 %s96, 1
      %p100 = scmp.eq.s32.totalorder %s20, 1
      %p101 = scmp.ne.s32.totalorder %s96, %s98
      %p102 = scmp.eq.s32.totalorder %s20, 0
      %p103 = por %p101, %p102
      %p104 = scmp.ne.s32.totalorder %s96, %s98
      %p105 = scmp.eq.s32.totalorder %s25, 1
      %p106 = por %p104, %p105
      %p107 = scmp.ne.s32.totalorder %s98, %s99
      %p108 = scmp.eq.s32.totalorder %s25, 0
      %p109 = por %p107, %p108
      %p110 = scmp.ne.s32.totalorder %s98, %s99
      %p111 = scmp.eq.s32.totalorder %s26, 1
      %p112 = por %p110, %p111
      %p114 = scmp.ne.s32.totalorder %s99, %s113
      %p115 = scmp.eq.s32.totalorder %s26, 0
      %p116 = por %p114, %p115
      %s118 = sadd.s32 %s117, 1
      %p121 = scmp.eq.s32.totalorder %s20, 1
      %p122 = scmp.ne.s32.totalorder %s117, %s119
      %p123 = scmp.eq.s32.totalorder %s20, 0
      %p124 = por %p122, %p123
      %p125 = scmp.ne.s32.totalorder %s117, %s119
      %p126 = scmp.eq.s32.totalorder %s25, 1
      %p127 = por %p125, %p126
      %p128 = scmp.ne.s32.totalorder %s119, %s120
      %p129 = scmp.eq.s32.totalorder %s25, 0
      %p130 = por %p128, %p129
      %p131 = scmp.ne.s32.totalorder %s119, %s120
      %p132 = scmp.eq.s32.totalorder %s26, 1
      %p133 = por %p131, %p132
      %p135 = scmp.ne.s32.totalorder %s120, %s134
      %p136 = scmp.eq.s32.totalorder %s26, 0
      %p137 = por %p135, %p136
      %s139 = sadd.s32 %s138, 1
      %p142 = scmp.eq.s32.totalorder %s20, 1
      %p143 = scmp.ne.s32.totalorder %s138, %s140
      %p144 = scmp.eq.s32.totalorder %s20, 0
      %p145 = por %p143, %p144
      %p146 = scmp.ne.s32.totalorder %s138, %s140
      %p147 = scmp.eq.s32.totalorder %s25, 1
      %p148 = por %p146, %p147
      %p149 = scmp.ne.s32.totalorder %s140, %s141
      %p150 = scmp.eq.s32.totalorder %s25, 0
      %p151 = por %p149, %p150
      %p152 = scmp.ne.s32.totalorder %s140, %s141
      %p153 = scmp.eq.s32.totalorder %s26, 1
      %p154 = por %p152, %p153
      %p156 = scmp.ne.s32.totalorder %s141, %s155
      %p157 = scmp.eq.s32.totalorder %s26, 0
      %p158 = por %p156, %p157
      %s160 = sadd.s32 %s159, 1
      %p163 = scmp.eq.s32.totalorder %s20, 1
      %p164 = scmp.ne.s32.totalorder %s159, %s161
      %p165 = scmp.eq.s32.totalorder %s20, 0
      %p166 = por %p164, %p165
      %p167 = scmp.ne.s32.totalorder %s159, %s161
      %p168 = scmp.eq.s32.totalorder %s25, 1
      %p169 = por %p167, %p168
      %p170 = scmp.ne.s32.totalorder %s161, %s162
      %p171 = scmp.eq.s32.totalorder %s25, 0
      %p172 = por %p170, %p171
      %p173 = scmp.ne.s32.totalorder %s161, %s162
      %p174 = scmp.eq.s32.totalorder %s26, 1
      %p175 = por %p173, %p174
      %p177 = scmp.ne.s32.totalorder %s162, %s176
      %p178 = scmp.eq.s32.totalorder %s26, 0
      %p179 = por %p177, %p178
      %s180 = ssub.s32 %s27, %s39
      %s181 = ssub.s32 %s28, %s35
      %s182 = sor.u32 %s180, %s181
      %p183 = scmp.eq.s32.totalorder %s182, 0
      %s185 = sadd.s32 %s184, 1
      %s186 = scalar_select %p183, %s184, %s185
      %p189 = pneg %p183
      %p190 = scmp.eq.s32.totalorder %s20, 1
      %p191 = por %p189, %p190
      %p192 = scmp.ne.s32.totalorder %s184, %s187
      %p193 = scmp.eq.s32.totalorder %s20, 0
      %p194 = por %p192, %p193
      %p195 = scmp.ne.s32.totalorder %s184, %s187
      %p196 = scmp.eq.s32.totalorder %s25, 1
      %p197 = por %p195, %p196
      %p198 = scmp.ne.s32.totalorder %s187, %s188
      %p199 = scmp.eq.s32.totalorder %s25, 0
      %p200 = por %p198, %p199
      %p201 = scmp.ne.s32.totalorder %s187, %s188
      %p202 = scmp.eq.s32.totalorder %s26, 1
      %p203 = por %p201, %p202
      %p205 = scmp.ne.s32.totalorder %s188, %s204
      %p206 = scmp.eq.s32.totalorder %s26, 0
      %p207 = por %p205, %p206
      %s208 = ssub.s32 %s27, %s39
      %s209 = ssub.s32 %s28, %s35
      %s210 = sor.u32 %s208, %s209
      %p211 = scmp.eq.s32.totalorder %s210, 0
      %s213 = sadd.s32 %s212, 1
      %s214 = scalar_select %p211, %s212, %s213
      %p217 = pneg %p211
      %p218 = scmp.eq.s32.totalorder %s20, 1
      %p219 = por %p217, %p218
      %p220 = scmp.ne.s32.totalorder %s212, %s215
      %p221 = scmp.eq.s32.totalorder %s20, 0
      %p222 = por %p220, %p221
      %p223 = scmp.ne.s32.totalorder %s212, %s215
      %p224 = scmp.eq.s32.totalorder %s25, 1
      %p225 = por %p223, %p224
      %p226 = scmp.ne.s32.totalorder %s215, %s216
      %p227 = scmp.eq.s32.totalorder %s25, 0
      %p228 = por %p226, %p227
      %p229 = scmp.ne.s32.totalorder %s215, %s216
      %p230 = scmp.eq.s32.totalorder %s26, 1
      %p231 = por %p229, %p230
      %p233 = scmp.ne.s32.totalorder %s216, %s232
      %p234 = scmp.eq.s32.totalorder %s26, 0
      %p235 = por %p233, %p234
      %p236 = scmp.le.s32.totalorder 1, %s20
      %p237 = scmp.lt.s32.totalorder %s20, 3
      %p238 = pnand %p236, %p237
      %p239 = pneg %p238
      // Predicated region
      $region9: #{tpu_custom_call.1} parent=5 // pred_check
        _
      $region10: #{tpu_custom_call.1} parent=5 // pred_check_branch
        %241 = sbr.rel (%p238) target = $region12
      $region11: #{tpu_custom_call.1} parent=5 // pred_region
        %s242 = ssub.s32 %s20, 1
        // Predicated region
        $region13: #{tpu_custom_call.1} parent=11 // pred_check
          %p243 = pneg %p109
        $region14: #{tpu_custom_call.1} parent=11 // pred_check_branch
          %245 = sbr.rel (%p243) target = $region16
        $region15: #{tpu_custom_call.1} parent=11 // pred_region
          _
        $region16: #{tpu_custom_call.1} parent=11 // pred_fallthru
          _
        // Predicated region
        $region17: #{tpu_custom_call.1} parent=11 // pred_check
          %p246 = pneg %p130
        $region18: #{tpu_custom_call.1} parent=11 // pred_check_branch
          %248 = sbr.rel (%p246) target = $region20
        $region19: #{tpu_custom_call.1} parent=11 // pred_region
          _
        $region20: #{tpu_custom_call.1} parent=11 // pred_fallthru
          _
        // Predicated region
        $region21: #{tpu_custom_call.1} parent=11 // pred_check
          %p249 = pneg %p151
        $region22: #{tpu_custom_call.1} parent=11 // pred_check_branch
          %251 = sbr.rel (%p249) target = $region24
        $region23: #{tpu_custom_call.1} parent=11 // pred_region
          _
        $region24: #{tpu_custom_call.1} parent=11 // pred_fallthru
          _
        // Predicated region
        $region25: #{tpu_custom_call.1} parent=11 // pred_check
          %p252 = pneg %p172
        $region26: #{tpu_custom_call.1} parent=11 // pred_check_branch
          %254 = sbr.rel (%p252) target = $region28
        $region27: #{tpu_custom_call.1} parent=11 // pred_region
          _
        $region28: #{tpu_custom_call.1} parent=11 // pred_fallthru
          _
      $region12: #{tpu_custom_call.1} parent=5 // pred_fallthru
        _
      %p255 = scmp.lt.s32.totalorder %s20, 2
      // Predicated region
      $region29: #{tpu_custom_call.1} parent=5 // pred_check
        %p256 = pneg %p255
      $region30: #{tpu_custom_call.1} parent=5 // pred_check_branch
        %258 = sbr.rel (%p256) target = $region32
      $region31: #{tpu_custom_call.1} parent=5 // pred_region
        // Predicated region
        $region33: #{tpu_custom_call.1} parent=31 // pred_check
          %p259 = pneg %p54
        $region34: #{tpu_custom_call.1} parent=31 // pred_check_branch
          %261 = sbr.rel (%p259) target = $region36
        $region35: #{tpu_custom_call.1} parent=31 // pred_region
          %p262 = scmp.lt.s32.totalorder %s27, 1
          %s263 = scalar_select %p262, %s27, 1
          %p264 = scmp.lt.s32.totalorder %s28, 0
          %s265 = scalar_select %p264, %s28, 0
          %s266 = sadd.s32 %s265, %s263
          %s267 = smul.addr %s266, 8
          %s268 = scalar_lea.vmem %s0, %s267
        $region36: #{tpu_custom_call.1} parent=31 // pred_fallthru
          _
        // Predicated region
        $region37: #{tpu_custom_call.1} parent=31 // pred_check
          %p269 = pneg %p82
        $region38: #{tpu_custom_call.1} parent=31 // pred_check_branch
          %271 = sbr.rel (%p269) target = $region40
        $region39: #{tpu_custom_call.1} parent=31 // pred_region
          %p272 = scmp.lt.s32.totalorder %s27, 1
          %s273 = scalar_select %p272, %s27, 1
          %p274 = scmp.lt.s32.totalorder %s28, 0
          %s275 = scalar_select %p274, %s28, 0
          %s276 = sadd.s32 %s275, %s273
          %s277 = smul.addr %s276, 8
          %s278 = scalar_lea.vmem %s1, %s277
        $region40: #{tpu_custom_call.1} parent=31 // pred_fallthru
          _
      $region32: #{tpu_custom_call.1} parent=5 // pred_fallthru
        _
      %p279 = scmp.le.s32.totalorder 1, %s20
      %p280 = scmp.lt.s32.totalorder %s20, 3
      %p281 = pnand %p279, %p280
      %p282 = pneg %p281
      // Predicated region
      $region41: #{tpu_custom_call.1} parent=5 // pred_check
        _
      $region42: #{tpu_custom_call.1} parent=5 // pred_check_branch
        %284 = sbr.rel (%p281) target = $region44
      $region43: #{tpu_custom_call.1} parent=5 // pred_region
        %s285 = ssub.s32 %s20, 1
        %p286 = scmp.lt.s32.totalorder %s29, 1
        %s287 = scalar_select %p286, %s29, 1
        %p288 = scmp.lt.s32.totalorder %s30, 0
        %s289 = scalar_select %p288, %s30, 0
        %s290 = sadd.s32 %s289, %s287
        %s291 = smul.addr %s290, 8
        %s292 = scalar_lea.vmem %s0, %s291
        %p293 = pneg %p60
        %p294 = pneg %p57
        %p295 = scmp.lt.s32.totalorder %s29, 1
        %s296 = scalar_select %p295, %s29, 1
        %p297 = scmp.lt.s32.totalorder %s30, 0
        %s298 = scalar_select %p297, %s30, 0
        %s299 = sadd.s32 %s298, %s296
        %s300 = smul.addr %s299, 8
        %s301 = scalar_lea.vmem %s1, %s300
        %p302 = pneg %p88
        %p303 = pneg %p85
        %p304 = pneg %p109
        %p305 = pneg %p106
        %p306 = pneg %p130
        %p307 = pneg %p127
        %p308 = pneg %p151
        %p309 = pneg %p148
        %p310 = pneg %p172
        %p311 = pneg %p169
        %p312 = pneg %p200
        %p313 = pneg %p197
        %s314 = sand.u32 %s187, 1
        %s315 = scalar_lea.sflag [#allocation3], %s314
        %s316 = sand.u32 %s187, 1
        %s317 = smul.addr %s316, 32
        %s318 = scalar_lea.vmem [#allocation2], %s317
        %p319 = pneg %p228
        %p320 = pneg %p225
        %s321 = sand.u32 %s215, 1
        %s322 = scalar_lea.sflag [#allocation5], %s321
        %s323 = sand.u32 %s215, 1
        %s324 = smul.addr %s323, 32
        %s325 = scalar_lea.vmem [#allocation4], %s324
        %p326 = scmp.lt.s32.totalorder %s29, 1
        %s327 = scalar_select %p326, %s29, 1
        %p328 = scmp.lt.s32.totalorder %s30, 0
        %s329 = scalar_select %p328, %s30, 0
        %s330 = sadd.s32 %s329, %s327
        %s331 = smul.addr %s330, 8
        %s332 = scalar_lea.vmem %s0, %s331
        %p333 = scmp.lt.s32.totalorder %s29, 1
        %s334 = scalar_select %p333, %s29, 1
        %p335 = scmp.lt.s32.totalorder %s30, 0
        %s336 = scalar_select %p335, %s30, 0
        %s337 = sadd.s32 %s336, %s334
        %s338 = smul.addr %s337, 8
        %s339 = scalar_lea.vmem %s1, %s338
        %v340 = vld [vmem:[%s332] sm:$0xff]
        %v341 = vld [vmem:[%s339] sm:$0xff]
        %v342 = vld [vmem:[%s2] sm:$0xff]
        %v343 = vld [vmem:[%s2 + $0x8] sm:$0xff]
        %v344 = vld [vmem:[%s2 + $0x10] sm:$0xff]
        %v345 = vld [vmem:[%s2 + $0x18] sm:$0xff]
        %v346 = vld [vmem:[%s3] sm:$0x1]
        %v348 = vlaneseq
        %v349 = vshrl.u32 %v348, 7
        %v350 = vsub.s32 0, %v349
        %v351 = vrot.slane %v346, %v350
        %vm353 = vcmask 261120
        %v355 = vsel %vm353, %v340, 0
        %357 = vmatprep.subr.mxu0 0.0
        %358 = vmatpush1.msra.mxu0 %v342
        %359 = vmatprep.subr.mxu0 0.0
        %360 = vmatpush1.msra.mxu0 %v343
        %361 = vmatprep.subr.mxu0 0.0
        %362 = vmatpush1.msra.mxu0 %v344
        %363 = vmatprep.subr.mxu0 0.0
        %364 = vmatpush1.msra.mxu0 %v345
        %365 = vmatprep.subr.mxu0 0.0
        %366 = vmatpush1.msra.mxu0 0.0
        %367 = vmatprep.subr.mxu0 0.0
        %368 = vmatpush1.msra.mxu0 0.0
        %369 = vmatprep.subr.mxu0 0.0
        %370 = vmatpush1.msra.mxu0 0.0
        %371 = vmatprep.subr.mxu0 0.0
        %372 = vmatpush1.msra.mxu0 0.0
        %373 = vmatprep.subr.mxu0 0.0
        %374 = vmatpush1.msra.mxu0 0.0
        %375 = vmatprep.subr.mxu0 0.0
        %376 = vmatpush1.msra.mxu0 0.0
        %377 = vmatprep.subr.mxu0 0.0
        %378 = vmatpush1.msra.mxu0 0.0
        %379 = vmatprep.subr.mxu0 0.0
        %380 = vmatpush1.msra.mxu0 0.0
        %381 = vmatprep.subr.mxu0 0.0
        %382 = vmatpush1.msra.mxu0 0.0
        %383 = vmatprep.subr.mxu0 0.0
        %384 = vmatpush1.msra.mxu0 0.0
        %385 = vmatprep.subr.mxu0 0.0
        %386 = vmatpush1.msra.mxu0 0.0
        %387 = vmatprep.subr.mxu0 0.0
        %388 = vmatpush1.msra.mxu0 0.0
        %389 = vmatprep.subr.mxu0 0.0
        %390 = vmatpush1.msra.mxu0 0.0
        %391 = vmatprep.subr.mxu0 0.0
        %392 = vmatpush1.msra.mxu0 0.0
        %393 = vmatprep.subr.mxu0 0.0
        %394 = vmatpush1.msra.mxu0 0.0
        %395 = vmatprep.subr.mxu0 0.0
        %396 = vmatpush1.msra.mxu0 0.0
        %397 = vmatprep.subr.mxu0 0.0
        %398 = vmatpush1.msra.mxu0 0.0
        %399 = vmatprep.subr.mxu0 0.0
        %400 = vmatpush1.msra.mxu0 0.0
        %401 = vmatprep.subr.mxu0 0.0
        %402 = vmatpush1.msra.mxu0 0.0
        %403 = vmatprep.subr.mxu0 0.0
        %404 = vmatpush1.msra.mxu0 0.0
        %405 = vmatprep.subr.mxu0 0.0
        %406 = vmatpush1.msra.mxu0 0.0
        %407 = vmatprep.subr.mxu0 0.0
        %408 = vmatpush1.msra.mxu0 0.0
        %409 = vmatprep.subr.mxu0 0.0
        %410 = vmatpush1.msra.mxu0 0.0
        %411 = vmatprep.subr.mxu0 0.0
        %412 = vmatpush1.msra.mxu0 0.0
        %413 = vmatprep.subr.mxu0 0.0
        %414 = vmatpush1.msra.mxu0 0.0
        %415 = vmatprep.subr.mxu0 0.0
        %416 = vmatpush1.msra.mxu0 0.0
        %417 = vmatprep.subr.mxu0 0.0
        %418 = vmatpush1.msra.mxu0 0.0
        %419 = vmatprep.subr.mxu0 0.0
        %420 = vmatpush1.msra.mxu0 0.0
        %421 = vmatprep.mubr.f32.mxu0 0.0
        %422 = vmatmul.mubr.f32.gmra.mrb[0].mxu0 %v355
        %v423 = vpop.f32.mrb[0].mxu0
        %v424 = vadd.f32 %v351, %v423
        %v425 = vpop.f32.mrb[0].mxu0
        %426 = vdwg.mxu0
        %v427 = vld [vmem:[%s4] sm:$0xff]
        %v428 = vld [vmem:[%s4 + $0x8] sm:$0xff]
        %v429 = vld [vmem:[%s4 + $0x10] sm:$0xff]
        %v430 = vld [vmem:[%s4 + $0x18] sm:$0xff]
        %v431 = vld [vmem:[%s5] sm:$0x1]
        %v433 = vlaneseq
        %v434 = vshrl.u32 %v433, 7
        %v435 = vsub.s32 0, %v434
        %v436 = vrot.slane %v431, %v435
        %v439 = vsel %vm353, %v341, 0
        %441 = vmatprep.subr.mxu0 0.0
        %442 = vmatpush1.msra.mxu0 %v427
        %443 = vmatprep.subr.mxu0 0.0
        %444 = vmatpush1.msra.mxu0 %v428
        %445 = vmatprep.subr.mxu0 0.0
        %446 = vmatpush1.msra.mxu0 %v429
        %447 = vmatprep.subr.mxu0 0.0
        %448 = vmatpush1.msra.mxu0 %v430
        %449 = vmatprep.subr.mxu0 0.0
        %450 = vmatpush1.msra.mxu0 0.0
        %451 = vmatprep.subr.mxu0 0.0
        %452 = vmatpush1.msra.mxu0 0.0
        %453 = vmatprep.subr.mxu0 0.0
        %454 = vmatpush1.msra.mxu0 0.0
        %455 = vmatprep.subr.mxu0 0.0
        %456 = vmatpush1.msra.mxu0 0.0
        %457 = vmatprep.subr.mxu0 0.0
        %458 = vmatpush1.msra.mxu0 0.0
        %459 = vmatprep.subr.mxu0 0.0
        %460 = vmatpush1.msra.mxu0 0.0
        %461 = vmatprep.subr.mxu0 0.0
        %462 = vmatpush1.msra.mxu0 0.0
        %463 = vmatprep.subr.mxu0 0.0
        %464 = vmatpush1.msra.mxu0 0.0
        %465 = vmatprep.subr.mxu0 0.0
        %466 = vmatpush1.msra.mxu0 0.0
        %467 = vmatprep.subr.mxu0 0.0
        %468 = vmatpush1.msra.mxu0 0.0
        %469 = vmatprep.subr.mxu0 0.0
        %470 = vmatpush1.msra.mxu0 0.0
        %471 = vmatprep.subr.mxu0 0.0
        %472 = vmatpush1.msra.mxu0 0.0
        %473 = vmatprep.subr.mxu0 0.0
        %474 = vmatpush1.msra.mxu0 0.0
        %475 = vmatprep.subr.mxu0 0.0
        %476 = vmatpush1.msra.mxu0 0.0
        %477 = vmatprep.subr.mxu0 0.0
        %478 = vmatpush1.msra.mxu0 0.0
        %479 = vmatprep.subr.mxu0 0.0
        %480 = vmatpush1.msra.mxu0 0.0
        %481 = vmatprep.subr.mxu0 0.0
        %482 = vmatpush1.msra.mxu0 0.0
        %483 = vmatprep.subr.mxu0 0.0
        %484 = vmatpush1.msra.mxu0 0.0
        %485 = vmatprep.subr.mxu0 0.0
        %486 = vmatpush1.msra.mxu0 0.0
        %487 = vmatprep.subr.mxu0 0.0
        %488 = vmatpush1.msra.mxu0 0.0
        %489 = vmatprep.subr.mxu0 0.0
        %490 = vmatpush1.msra.mxu0 0.0
        %491 = vmatprep.subr.mxu0 0.0
        %492 = vmatpush1.msra.mxu0 0.0
        %493 = vmatprep.subr.mxu0 0.0
        %494 = vmatpush1.msra.mxu0 0.0
        %495 = vmatprep.subr.mxu0 0.0
        %496 = vmatpush1.msra.mxu0 0.0
        %497 = vmatprep.subr.mxu0 0.0
        %498 = vmatpush1.msra.mxu0 0.0
        %499 = vmatprep.subr.mxu0 0.0
        %500 = vmatpush1.msra.mxu0 0.0
        %501 = vmatprep.subr.mxu0 0.0
        %502 = vmatpush1.msra.mxu0 0.0
        %503 = vmatprep.subr.mxu0 0.0
        %504 = vmatpush1.msra.mxu0 0.0
        %505 = vmatprep.mubr.f32.mxu0 0.0
        %506 = vmatmul.mubr.f32.gmra.mrb[0].mxu0 %v439
        %v507 = vpop.f32.mrb[0].mxu0
        %v508 = vadd.f32 %v436, %v507
        %v509 = vpop.f32.mrb[0].mxu0
        %510 = vdwg.mxu0
        %vm511 = vcmask 64512
        %512 = vst.msk [vmem:[%s318] sm:$0xff] %vm511, %v424
        %513 = vst.msk [vmem:[%s325] sm:$0xff] %vm511, %v508
        %s514 = scalar_lea.vmem %s2, 32
        %v515 = vld [vmem:[%s514] sm:$0xff]
        %v516 = vld [vmem:[%s514 + $0x8] sm:$0xff]
        %v517 = vld [vmem:[%s514 + $0x10] sm:$0xff]
        %v518 = vld [vmem:[%s514 + $0x18] sm:$0xff]
        %s519 = scalar_lea.vmem %s3, 1
        %v520 = vld [vmem:[%s519] sm:$0x1]
        %v522 = vlaneseq
        %v523 = vshrl.u32 %v522, 7
        %v524 = vsub.s32 0, %v523
        %v525 = vrot.slane %v520, %v524
        %527 = vmatprep.subr.mxu0 0.0
        %528 = vmatpush1.msra.mxu0 %v515
        %529 = vmatprep.subr.mxu0 0.0
        %530 = vmatpush1.msra.mxu0 %v516
        %531 = vmatprep.subr.mxu0 0.0
        %532 = vmatpush1.msra.mxu0 %v517
        %533 = vmatprep.subr.mxu0 0.0
        %534 = vmatpush1.msra.mxu0 %v518
        %535 = vmatprep.subr.mxu0 0.0
        %536 = vmatpush1.msra.mxu0 0.0
        %537 = vmatprep.subr.mxu0 0.0
        %538 = vmatpush1.msra.mxu0 0.0
        %539 = vmatprep.subr.mxu0 0.0
        %540 = vmatpush1.msra.mxu0 0.0
        %541 = vmatprep.subr.mxu0 0.0
        %542 = vmatpush1.msra.mxu0 0.0
        %543 = vmatprep.subr.mxu0 0.0
        %544 = vmatpush1.msra.mxu0 0.0
        %545 = vmatprep.subr.mxu0 0.0
        %546 = vmatpush1.msra.mxu0 0.0
        %547 = vmatprep.subr.mxu0 0.0
        %548 = vmatpush1.msra.mxu0 0.0
        %549 = vmatprep.subr.mxu0 0.0
        %550 = vmatpush1.msra.mxu0 0.0
        %551 = vmatprep.subr.mxu0 0.0
        %552 = vmatpush1.msra.mxu0 0.0
        %553 = vmatprep.subr.mxu0 0.0
        %554 = vmatpush1.msra.mxu0 0.0
        %555 = vmatprep.subr.mxu0 0.0
        %556 = vmatpush1.msra.mxu0 0.0
        %557 = vmatprep.subr.mxu0 0.0
        %558 = vmatpush1.msra.mxu0 0.0
        %559 = vmatprep.subr.mxu0 0.0
        %560 = vmatpush1.msra.mxu0 0.0
        %561 = vmatprep.subr.mxu0 0.0
        %562 = vmatpush1.msra.mxu0 0.0
        %563 = vmatprep.subr.mxu0 0.0
        %564 = vmatpush1.msra.mxu0 0.0
        %565 = vmatprep.subr.mxu0 0.0
        %566 = vmatpush1.msra.mxu0 0.0
        %567 = vmatprep.subr.mxu0 0.0
        %568 = vmatpush1.msra.mxu0 0.0
        %569 = vmatprep.subr.mxu0 0.0
        %570 = vmatpush1.msra.mxu0 0.0
        %571 = vmatprep.subr.mxu0 0.0
        %572 = vmatpush1.msra.mxu0 0.0
        %573 = vmatprep.subr.mxu0 0.0
        %574 = vmatpush1.msra.mxu0 0.0
        %575 = vmatprep.subr.mxu0 0.0
        %576 = vmatpush1.msra.mxu0 0.0
        %577 = vmatprep.subr.mxu0 0.0
        %578 = vmatpush1.msra.mxu0 0.0
        %579 = vmatprep.subr.mxu0 0.0
        %580 = vmatpush1.msra.mxu0 0.0
        %581 = vmatprep.subr.mxu0 0.0
        %582 = vmatpush1.msra.mxu0 0.0
        %583 = vmatprep.subr.mxu0 0.0
        %584 = vmatpush1.msra.mxu0 0.0
        %585 = vmatprep.subr.mxu0 0.0
        %586 = vmatpush1.msra.mxu0 0.0
        %587 = vmatprep.subr.mxu0 0.0
        %588 = vmatpush1.msra.mxu0 0.0
        %589 = vmatprep.subr.mxu0 0.0
        %590 = vmatpush1.msra.mxu0 0.0
        %591 = vmatprep.mubr.f32.mxu0 0.0
        %592 = vmatmul.mubr.f32.gmra.mrb[0].mxu0 %v355
        %v593 = vpop.f32.mrb[0].mxu0
        %v594 = vadd.f32 %v525, %v593
        %v595 = vpop.f32.mrb[0].mxu0
        %596 = vdwg.mxu0
        %s597 = scalar_lea.vmem %s4, 32
        %v598 = vld [vmem:[%s597] sm:$0xff]
        %v599 = vld [vmem:[%s597 + $0x8] sm:$0xff]
        %v600 = vld [vmem:[%s597 + $0x10] sm:$0xff]
        %v601 = vld [vmem:[%s597 + $0x18] sm:$0xff]
        %s602 = scalar_lea.vmem %s5, 1
        %v603 = vld [vmem:[%s602] sm:$0x1]
        %v605 = vlaneseq
        %v606 = vshrl.u32 %v605, 7
        %v607 = vsub.s32 0, %v606
        %v608 = vrot.slane %v603, %v607
        %610 = vmatprep.subr.mxu0 0.0
        %611 = vmatpush1.msra.mxu0 %v598
        %612 = vmatprep.subr.mxu0 0.0
        %613 = vmatpush1.msra.mxu0 %v599
        %614 = vmatprep.subr.mxu0 0.0
        %615 = vmatpush1.msra.mxu0 %v600
        %616 = vmatprep.subr.mxu0 0.0
        %617 = vmatpush1.msra.mxu0 %v601
        %618 = vmatprep.subr.mxu0 0.0
        %619 = vmatpush1.msra.mxu0 0.0
        %620 = vmatprep.subr.mxu0 0.0
        %621 = vmatpush1.msra.mxu0 0.0
        %622 = vmatprep.subr.mxu0 0.0
        %623 = vmatpush1.msra.mxu0 0.0
        %624 = vmatprep.subr.mxu0 0.0
        %625 = vmatpush1.msra.mxu0 0.0
        %626 = vmatprep.subr.mxu0 0.0
        %627 = vmatpush1.msra.mxu0 0.0
        %628 = vmatprep.subr.mxu0 0.0
        %629 = vmatpush1.msra.mxu0 0.0
        %630 = vmatprep.subr.mxu0 0.0
        %631 = vmatpush1.msra.mxu0 0.0
        %632 = vmatprep.subr.mxu0 0.0
        %633 = vmatpush1.msra.mxu0 0.0
        %634 = vmatprep.subr.mxu0 0.0
        %635 = vmatpush1.msra.mxu0 0.0
        %636 = vmatprep.subr.mxu0 0.0
        %637 = vmatpush1.msra.mxu0 0.0
        %638 = vmatprep.subr.mxu0 0.0
        %639 = vmatpush1.msra.mxu0 0.0
        %640 = vmatprep.subr.mxu0 0.0
        %641 = vmatpush1.msra.mxu0 0.0
        %642 = vmatprep.subr.mxu0 0.0
        %643 = vmatpush1.msra.mxu0 0.0
        %644 = vmatprep.subr.mxu0 0.0
        %645 = vmatpush1.msra.mxu0 0.0
        %646 = vmatprep.subr.mxu0 0.0
        %647 = vmatpush1.msra.mxu0 0.0
        %648 = vmatprep.subr.mxu0 0.0
        %649 = vmatpush1.msra.mxu0 0.0
        %650 = vmatprep.subr.mxu0 0.0
        %651 = vmatpush1.msra.mxu0 0.0
        %652 = vmatprep.subr.mxu0 0.0
        %653 = vmatpush1.msra.mxu0 0.0
        %654 = vmatprep.subr.mxu0 0.0
        %655 = vmatpush1.msra.mxu0 0.0
        %656 = vmatprep.subr.mxu0 0.0
        %657 = vmatpush1.msra.mxu0 0.0
        %658 = vmatprep.subr.mxu0 0.0
        %659 = vmatpush1.msra.mxu0 0.0
        %660 = vmatprep.subr.mxu0 0.0
        %661 = vmatpush1.msra.mxu0 0.0
        %662 = vmatprep.subr.mxu0 0.0
        %663 = vmatpush1.msra.mxu0 0.0
        %664 = vmatprep.subr.mxu0 0.0
        %665 = vmatpush1.msra.mxu0 0.0
        %666 = vmatprep.subr.mxu0 0.0
        %667 = vmatpush1.msra.mxu0 0.0
        %668 = vmatprep.subr.mxu0 0.0
        %669 = vmatpush1.msra.mxu0 0.0
        %670 = vmatprep.subr.mxu0 0.0
        %671 = vmatpush1.msra.mxu0 0.0
        %672 = vmatprep.subr.mxu0 0.0
        %673 = vmatpush1.msra.mxu0 0.0
        %674 = vmatprep.mubr.f32.mxu0 0.0
        %675 = vmatmul.mubr.f32.gmra.mrb[0].mxu0 %v439
        %v676 = vpop.f32.mrb[0].mxu0
        %v677 = vadd.f32 %v608, %v676
        %v678 = vpop.f32.mrb[0].mxu0
        %679 = vdwg.mxu0
        %s680 = scalar_lea.vmem %s318, 8 [#allocation2]
        %681 = vst.msk [vmem:[%s680] sm:$0xff] %vm511, %v594
        %s682 = scalar_lea.vmem %s325, 8 [#allocation4]
        %683 = vst.msk [vmem:[%s682] sm:$0xff] %vm511, %v677
        %s684 = scalar_lea.vmem %s2, 64
        %v685 = vld [vmem:[%s684] sm:$0xff]
        %v686 = vld [vmem:[%s684 + $0x8] sm:$0xff]
        %v687 = vld [vmem:[%s684 + $0x10] sm:$0xff]
        %v688 = vld [vmem:[%s684 + $0x18] sm:$0xff]
        %s689 = scalar_lea.vmem %s3, 2
        %v690 = vld [vmem:[%s689] sm:$0x1]
        %v692 = vlaneseq
        %v693 = vshrl.u32 %v692, 7
        %v694 = vsub.s32 0, %v693
        %v695 = vrot.slane %v690, %v694
        %697 = vmatprep.subr.mxu0 0.0
        %698 = vmatpush1.msra.mxu0 %v685
        %699 = vmatprep.subr.mxu0 0.0
        %700 = vmatpush1.msra.mxu0 %v686
        %701 = vmatprep.subr.mxu0 0.0
        %702 = vmatpush1.msra.mxu0 %v687
        %703 = vmatprep.subr.mxu0 0.0
        %704 = vmatpush1.msra.mxu0 %v688
        %705 = vmatprep.subr.mxu0 0.0
        %706 = vmatpush1.msra.mxu0 0.0
        %707 = vmatprep.subr.mxu0 0.0
        %708 = vmatpush1.msra.mxu0 0.0
        %709 = vmatprep.subr.mxu0 0.0
        %710 = vmatpush1.msra.mxu0 0.0
        %711 = vmatprep.subr.mxu0 0.0
        %712 = vmatpush1.msra.mxu0 0.0
        %713 = vmatprep.subr.mxu0 0.0
        %714 = vmatpush1.msra.mxu0 0.0
        %715 = vmatprep.subr.mxu0 0.0
        %716 = vmatpush1.msra.mxu0 0.0
        %717 = vmatprep.subr.mxu0 0.0
        %718 = vmatpush1.msra.mxu0 0.0
        %719 = vmatprep.subr.mxu0 0.0
        %720 = vmatpush1.msra.mxu0 0.0
        %721 = vmatprep.subr.mxu0 0.0
        %722 = vmatpush1.msra.mxu0 0.0
        %723 = vmatprep.subr.mxu0 0.0
        %724 = vmatpush1.msra.mxu0 0.0
        %725 = vmatprep.subr.mxu0 0.0
        %726 = vmatpush1.msra.mxu0 0.0
        %727 = vmatprep.subr.mxu0 0.0
        %728 = vmatpush1.msra.mxu0 0.0
        %729 = vmatprep.subr.mxu0 0.0
        %730 = vmatpush1.msra.mxu0 0.0
        %731 = vmatprep.subr.mxu0 0.0
        %732 = vmatpush1.msra.mxu0 0.0
        %733 = vmatprep.subr.mxu0 0.0
        %734 = vmatpush1.msra.mxu0 0.0
        %735 = vmatprep.subr.mxu0 0.0
        %736 = vmatpush1.msra.mxu0 0.0
        %737 = vmatprep.subr.mxu0 0.0
        %738 = vmatpush1.msra.mxu0 0.0
        %739 = vmatprep.subr.mxu0 0.0
        %740 = vmatpush1.msra.mxu0 0.0
        %741 = vmatprep.subr.mxu0 0.0
        %742 = vmatpush1.msra.mxu0 0.0
        %743 = vmatprep.subr.mxu0 0.0
        %744 = vmatpush1.msra.mxu0 0.0
        %745 = vmatprep.subr.mxu0 0.0
        %746 = vmatpush1.msra.mxu0 0.0
        %747 = vmatprep.subr.mxu0 0.0
        %748 = vmatpush1.msra.mxu0 0.0
        %749 = vmatprep.subr.mxu0 0.0
        %750 = vmatpush1.msra.mxu0 0.0
        %751 = vmatprep.subr.mxu0 0.0
        %752 = vmatpush1.msra.mxu0 0.0
        %753 = vmatprep.subr.mxu0 0.0
        %754 = vmatpush1.msra.mxu0 0.0
        %755 = vmatprep.subr.mxu0 0.0
        %756 = vmatpush1.msra.mxu0 0.0
        %757 = vmatprep.subr.mxu0 0.0
        %758 = vmatpush1.msra.mxu0 0.0
        %759 = vmatprep.subr.mxu0 0.0
        %760 = vmatpush1.msra.mxu0 0.0
        %761 = vmatprep.mubr.f32.mxu0 0.0
        %762 = vmatmul.mubr.f32.gmra.mrb[0].mxu0 %v355
        %v763 = vpop.f32.mrb[0].mxu0
        %v764 = vadd.f32 %v695, %v763
        %v765 = vpop.f32.mrb[0].mxu0
        %766 = vdwg.mxu0
        %s767 = scalar_lea.vmem %s4, 64
        %v768 = vld [vmem:[%s767] sm:$0xff]
        %v769 = vld [vmem:[%s767 + $0x8] sm:$0xff]
        %v770 = vld [vmem:[%s767 + $0x10] sm:$0xff]
        %v771 = vld [vmem:[%s767 + $0x18] sm:$0xff]
        %s772 = scalar_lea.vmem %s5, 2
        %v773 = vld [vmem:[%s772] sm:$0x1]
        %v775 = vlaneseq
        %v776 = vshrl.u32 %v775, 7
        %v777 = vsub.s32 0, %v776
        %v778 = vrot.slane %v773, %v777
        %780 = vmatprep.subr.mxu0 0.0
        %781 = vmatpush1.msra.mxu0 %v768
        %782 = vmatprep.subr.mxu0 0.0
        %783 = vmatpush1.msra.mxu0 %v769
        %784 = vmatprep.subr.mxu0 0.0
        %785 = vmatpush1.msra.mxu0 %v770
        %786 = vmatprep.subr.mxu0 0.0
        %787 = vmatpush1.msra.mxu0 %v771
        %788 = vmatprep.subr.mxu0 0.0
        %789 = vmatpush1.msra.mxu0 0.0
        %790 = vmatprep.subr.mxu0 0.0
        %791 = vmatpush1.msra.mxu0 0.0
        %792 = vmatprep.subr.mxu0 0.0
        %793 = vmatpush1.msra.mxu0 0.0
        %794 = vmatprep.subr.mxu0 0.0
        %795 = vmatpush1.msra.mxu0 0.0
        %796 = vmatprep.subr.mxu0 0.0
        %797 = vmatpush1.msra.mxu0 0.0
        %798 = vmatprep.subr.mxu0 0.0
        %799 = vmatpush1.msra.mxu0 0.0
        %800 = vmatprep.subr.mxu0 0.0
        %801 = vmatpush1.msra.mxu0 0.0
        %802 = vmatprep.subr.mxu0 0.0
        %803 = vmatpush1.msra.mxu0 0.0
        %804 = vmatprep.subr.mxu0 0.0
        %805 = vmatpush1.msra.mxu0 0.0
        %806 = vmatprep.subr.mxu0 0.0
        %807 = vmatpush1.msra.mxu0 0.0
        %808 = vmatprep.subr.mxu0 0.0
        %809 = vmatpush1.msra.mxu0 0.0
        %810 = vmatprep.subr.mxu0 0.0
        %811 = vmatpush1.msra.mxu0 0.0
        %812 = vmatprep.subr.mxu0 0.0
        %813 = vmatpush1.msra.mxu0 0.0
        %814 = vmatprep.subr.mxu0 0.0
        %815 = vmatpush1.msra.mxu0 0.0
        %816 = vmatprep.subr.mxu0 0.0
        %817 = vmatpush1.msra.mxu0 0.0
        %818 = vmatprep.subr.mxu0 0.0
        %819 = vmatpush1.msra.mxu0 0.0
        %820 = vmatprep.subr.mxu0 0.0
        %821 = vmatpush1.msra.mxu0 0.0
        %822 = vmatprep.subr.mxu0 0.0
        %823 = vmatpush1.msra.mxu0 0.0
        %824 = vmatprep.subr.mxu0 0.0
        %825 = vmatpush1.msra.mxu0 0.0
        %826 = vmatprep.subr.mxu0 0.0
        %827 = vmatpush1.msra.mxu0 0.0
        %828 = vmatprep.subr.mxu0 0.0
        %829 = vmatpush1.msra.mxu0 0.0
        %830 = vmatprep.subr.mxu0 0.0
        %831 = vmatpush1.msra.mxu0 0.0
        %832 = vmatprep.subr.mxu0 0.0
        %833 = vmatpush1.msra.mxu0 0.0
        %834 = vmatprep.subr.mxu0 0.0
        %835 = vmatpush1.msra.mxu0 0.0
        %836 = vmatprep.subr.mxu0 0.0
        %837 = vmatpush1.msra.mxu0 0.0
        %838 = vmatprep.subr.mxu0 0.0
        %839 = vmatpush1.msra.mxu0 0.0
        %840 = vmatprep.subr.mxu0 0.0
        %841 = vmatpush1.msra.mxu0 0.0
        %842 = vmatprep.subr.mxu0 0.0
        %843 = vmatpush1.msra.mxu0 0.0
        %844 = vmatprep.mubr.f32.mxu0 0.0
        %845 = vmatmul.mubr.f32.gmra.mrb[0].mxu0 %v439
        %v846 = vpop.f32.mrb[0].mxu0
        %v847 = vadd.f32 %v778, %v846
        %v848 = vpop.f32.mrb[0].mxu0
        %849 = vdwg.mxu0
        %s850 = scalar_lea.vmem %s318, 16 [#allocation2]
        %851 = vst.msk [vmem:[%s850] sm:$0xff] %vm511, %v764
        %s852 = scalar_lea.vmem %s325, 16 [#allocation4]
        %853 = vst.msk [vmem:[%s852] sm:$0xff] %vm511, %v847
        %s854 = scalar_lea.vmem %s2, 96
        %v855 = vld [vmem:[%s854] sm:$0xff]
        %v856 = vld [vmem:[%s854 + $0x8] sm:$0xff]
        %v857 = vld [vmem:[%s854 + $0x10] sm:$0xff]
        %v858 = vld [vmem:[%s854 + $0x18] sm:$0xff]
        %s859 = scalar_lea.vmem %s3, 3
        %v860 = vld [vmem:[%s859] sm:$0x1]
        %v862 = vlaneseq
        %v863 = vshrl.u32 %v862, 7
        %v864 = vsub.s32 0, %v863
        %v865 = vrot.slane %v860, %v864
        %867 = vmatprep.subr.mxu0 0.0
        %868 = vmatpush1.msra.mxu0 %v855
        %869 = vmatprep.subr.mxu0 0.0
        %870 = vmatpush1.msra.mxu0 %v856
        %871 = vmatprep.subr.mxu0 0.0
        %872 = vmatpush1.msra.mxu0 %v857
        %873 = vmatprep.subr.mxu0 0.0
        %874 = vmatpush1.msra.mxu0 %v858
        %875 = vmatprep.subr.mxu0 0.0
        %876 = vmatpush1.msra.mxu0 0.0
        %877 = vmatprep.subr.mxu0 0.0
        %878 = vmatpush1.msra.mxu0 0.0
        %879 = vmatprep.subr.mxu0 0.0
        %880 = vmatpush1.msra.mxu0 0.0
        %881 = vmatprep.subr.mxu0 0.0
        %882 = vmatpush1.msra.mxu0 0.0
        %883 = vmatprep.subr.mxu0 0.0
        %884 = vmatpush1.msra.mxu0 0.0
        %885 = vmatprep.subr.mxu0 0.0
        %886 = vmatpush1.msra.mxu0 0.0
        %887 = vmatprep.subr.mxu0 0.0
        %888 = vmatpush1.msra.mxu0 0.0
        %889 = vmatprep.subr.mxu0 0.0
        %890 = vmatpush1.msra.mxu0 0.0
        %891 = vmatprep.subr.mxu0 0.0
        %892 = vmatpush1.msra.mxu0 0.0
        %893 = vmatprep.subr.mxu0 0.0
        %894 = vmatpush1.msra.mxu0 0.0
        %895 = vmatprep.subr.mxu0 0.0
        %896 = vmatpush1.msra.mxu0 0.0
        %897 = vmatprep.subr.mxu0 0.0
        %898 = vmatpush1.msra.mxu0 0.0
        %899 = vmatprep.subr.mxu0 0.0
        %900 = vmatpush1.msra.mxu0 0.0
        %901 = vmatprep.subr.mxu0 0.0
        %902 = vmatpush1.msra.mxu0 0.0
        %903 = vmatprep.subr.mxu0 0.0
        %904 = vmatpush1.msra.mxu0 0.0
        %905 = vmatprep.subr.mxu0 0.0
        %906 = vmatpush1.msra.mxu0 0.0
        %907 = vmatprep.subr.mxu0 0.0
        %908 = vmatpush1.msra.mxu0 0.0
        %909 = vmatprep.subr.mxu0 0.0
        %910 = vmatpush1.msra.mxu0 0.0
        %911 = vmatprep.subr.mxu0 0.0
        %912 = vmatpush1.msra.mxu0 0.0
        %913 = vmatprep.subr.mxu0 0.0
        %914 = vmatpush1.msra.mxu0 0.0
        %915 = vmatprep.subr.mxu0 0.0
        %916 = vmatpush1.msra.mxu0 0.0
        %917 = vmatprep.subr.mxu0 0.0
        %918 = vmatpush1.msra.mxu0 0.0
        %919 = vmatprep.subr.mxu0 0.0
        %920 = vmatpush1.msra.mxu0 0.0
        %921 = vmatprep.subr.mxu0 0.0
        %922 = vmatpush1.msra.mxu0 0.0
        %923 = vmatprep.subr.mxu0 0.0
        %924 = vmatpush1.msra.mxu0 0.0
        %925 = vmatprep.subr.mxu0 0.0
        %926 = vmatpush1.msra.mxu0 0.0
        %927 = vmatprep.subr.mxu0 0.0
        %928 = vmatpush1.msra.mxu0 0.0
        %929 = vmatprep.subr.mxu0 0.0
        %930 = vmatpush1.msra.mxu0 0.0
        %931 = vmatprep.mubr.f32.mxu0 0.0
        %932 = vmatmul.mubr.f32.gmra.mrb[0].mxu0 %v355
        %v933 = vpop.f32.mrb[0].mxu0
        %v934 = vadd.f32 %v865, %v933
        %v935 = vpop.f32.mrb[0].mxu0
        %936 = vdwg.mxu0
        %s937 = scalar_lea.vmem %s4, 96
        %v938 = vld [vmem:[%s937] sm:$0xff]
        %v939 = vld [vmem:[%s937 + $0x8] sm:$0xff]
        %v940 = vld [vmem:[%s937 + $0x10] sm:$0xff]
        %v941 = vld [vmem:[%s937 + $0x18] sm:$0xff]
        %s942 = scalar_lea.vmem %s5, 3
        %v943 = vld [vmem:[%s942] sm:$0x1]
        %v945 = vlaneseq
        %v946 = vshrl.u32 %v945, 7
        %v947 = vsub.s32 0, %v946
        %v948 = vrot.slane %v943, %v947
        %950 = vmatprep.subr.mxu0 0.0
        %951 = vmatpush1.msra.mxu0 %v938
        %952 = vmatprep.subr.mxu0 0.0
        %953 = vmatpush1.msra.mxu0 %v939
        %954 = vmatprep.subr.mxu0 0.0
        %955 = vmatpush1.msra.mxu0 %v940
        %956 = vmatprep.subr.mxu0 0.0
        %957 = vmatpush1.msra.mxu0 %v941
        %958 = vmatprep.subr.mxu0 0.0
        %959 = vmatpush1.msra.mxu0 0.0
        %960 = vmatprep.subr.mxu0 0.0
        %961 = vmatpush1.msra.mxu0 0.0
        %962 = vmatprep.subr.mxu0 0.0
        %963 = vmatpush1.msra.mxu0 0.0
        %964 = vmatprep.subr.mxu0 0.0
        %965 = vmatpush1.msra.mxu0 0.0
        %966 = vmatprep.subr.mxu0 0.0
        %967 = vmatpush1.msra.mxu0 0.0
        %968 = vmatprep.subr.mxu0 0.0
        %969 = vmatpush1.msra.mxu0 0.0
        %970 = vmatprep.subr.mxu0 0.0
        %971 = vmatpush1.msra.mxu0 0.0
        %972 = vmatprep.subr.mxu0 0.0
        %973 = vmatpush1.msra.mxu0 0.0
        %974 = vmatprep.subr.mxu0 0.0
        %975 = vmatpush1.msra.mxu0 0.0
        %976 = vmatprep.subr.mxu0 0.0
        %977 = vmatpush1.msra.mxu0 0.0
        %978 = vmatprep.subr.mxu0 0.0
        %979 = vmatpush1.msra.mxu0 0.0
        %980 = vmatprep.subr.mxu0 0.0
        %981 = vmatpush1.msra.mxu0 0.0
        %982 = vmatprep.subr.mxu0 0.0
        %983 = vmatpush1.msra.mxu0 0.0
        %984 = vmatprep.subr.mxu0 0.0
        %985 = vmatpush1.msra.mxu0 0.0
        %986 = vmatprep.subr.mxu0 0.0
        %987 = vmatpush1.msra.mxu0 0.0
        %988 = vmatprep.subr.mxu0 0.0
        %989 = vmatpush1.msra.mxu0 0.0
        %990 = vmatprep.subr.mxu0 0.0
        %991 = vmatpush1.msra.mxu0 0.0
        %992 = vmatprep.subr.mxu0 0.0
        %993 = vmatpush1.msra.mxu0 0.0
        %994 = vmatprep.subr.mxu0 0.0
        %995 = vmatpush1.msra.mxu0 0.0
        %996 = vmatprep.subr.mxu0 0.0
        %997 = vmatpush1.msra.mxu0 0.0
        %998 = vmatprep.subr.mxu0 0.0
        %999 = vmatpush1.msra.mxu0 0.0
        %1000 = vmatprep.subr.mxu0 0.0
        %1001 = vmatpush1.msra.mxu0 0.0
        %1002 = vmatprep.subr.mxu0 0.0
        %1003 = vmatpush1.msra.mxu0 0.0
        %1004 = vmatprep.subr.mxu0 0.0
        %1005 = vmatpush1.msra.mxu0 0.0
        %1006 = vmatprep.subr.mxu0 0.0
        %1007 = vmatpush1.msra.mxu0 0.0
        %1008 = vmatprep.subr.mxu0 0.0
        %1009 = vmatpush1.msra.mxu0 0.0
        %1010 = vmatprep.subr.mxu0 0.0
        %1011 = vmatpush1.msra.mxu0 0.0
        %1012 = vmatprep.subr.mxu0 0.0
        %1013 = vmatpush1.msra.mxu0 0.0
        %1014 = vmatprep.mubr.f32.mxu0 0.0
        %1015 = vmatmul.mubr.f32.gmra.mrb[0].mxu0 %v439
        %v1016 = vpop.f32.mrb[0].mxu0
        %v1017 = vadd.f32 %v948, %v1016
        %v1018 = vpop.f32.mrb[0].mxu0
        %1019 = vdwg.mxu0
        %s1020 = scalar_lea.vmem %s318, 24 [#allocation2]
        %1021 = vst.msk [vmem:[%s1020] sm:$0xff] %vm511, %v934
        %s1022 = scalar_lea.vmem %s325, 24 [#allocation4]
        %1023 = vst.msk [vmem:[%s1022] sm:$0xff] %vm511, %v1017
        %s1024 = sand.u32 %s187, 1
        %s1025 = scalar_lea.sflag [#allocation3], %s1024
        %s1026 = sand.u32 %s187, 1
        %s1027 = smul.addr %s1026, 32
        %s1028 = scalar_lea.vmem [#allocation2], %s1027
        %s1029 = sand.u32 %s215, 1
        %s1030 = scalar_lea.sflag [#allocation5], %s1029
        %s1031 = sand.u32 %s215, 1
        %s1032 = smul.addr %s1031, 32
        %s1033 = scalar_lea.vmem [#allocation4], %s1032
        // Predicated region
        $region45: #{tpu_custom_call.1} parent=43 // pred_check
          %p1034 = pneg %p197
        $region46: #{tpu_custom_call.1} parent=43 // pred_check_branch
          %1036 = sbr.rel (%p1034) target = $region48
        $region47: #{tpu_custom_call.1} parent=43 // pred_region
          %s1038 = ssub.s32 512, 512
          %1039 = vsyncadd %s1025, %s1038
          %s1040 = smul.addr %s29, 4
          %s1041 = sadd.s32 %s30, %s1040
          %s1042 = smul.addr %s1041, 128
          %s1043 = scalar_lea.hbm %s6, %s1042
          %s1044 = sshll.u32 %s1028, 4
          %s1045 = int_to_ptr.vmem [resolvable:$true] %s1044
          %1050 = dma.vmem_to_hbm [thread:$0]  %s1045, 512, %s1043, %s1025, 128, 128, 8
        $region48: #{tpu_custom_call.1} parent=43 // pred_fallthru
          _
        // Predicated region
        $region49: #{tpu_custom_call.1} parent=43 // pred_check
          %p1051 = pneg %p225
        $region50: #{tpu_custom_call.1} parent=43 // pred_check_branch
          %1053 = sbr.rel (%p1051) target = $region52
        $region51: #{tpu_custom_call.1} parent=43 // pred_region
          %s1055 = ssub.s32 512, 512
          %1056 = vsyncadd %s1030, %s1055
          %s1057 = smul.addr %s29, 4
          %s1058 = sadd.s32 %s30, %s1057
          %s1059 = smul.addr %s1058, 128
          %s1060 = scalar_lea.hbm %s7, %s1059
          %s1061 = sshll.u32 %s1033, 4
          %s1062 = int_to_ptr.vmem [resolvable:$true] %s1061
          %1067 = dma.vmem_to_hbm [thread:$0]  %s1062, 512, %s1060, %s1030, 128, 128, 8
        $region52: #{tpu_custom_call.1} parent=43 // pred_fallthru
          _
      $region44: #{tpu_custom_call.1} parent=5 // pred_fallthru
        _
      %p1068 = scmp.le.s32.totalorder 2, %s20
      // Predicated region
      $region53: #{tpu_custom_call.1} parent=5 // pred_check
        %p1069 = pneg %p1068
      $region54: #{tpu_custom_call.1} parent=5 // pred_check_branch
        %1071 = sbr.rel (%p1069) target = $region56
      $region55: #{tpu_custom_call.1} parent=5 // pred_region
        %s1072 = ssub.s32 %s20, 2
        // Predicated region
        $region57: #{tpu_custom_call.1} parent=55 // pred_check
          %p1073 = pneg %p203
        $region58: #{tpu_custom_call.1} parent=55 // pred_check_branch
          %1075 = sbr.rel (%p1073) target = $region60
        $region59: #{tpu_custom_call.1} parent=55 // pred_region
          %s1076 = sand.u32 %s188, 1
          %s1077 = scalar_lea.sflag [#allocation3], %s1076
          %s1078 = sand.u32 %s188, 1
          %s1079 = smul.addr %s1078, 32
          %s1080 = scalar_lea.vmem [#allocation2], %s1079
          %1081 = dma.done %s1077, 512
        $region60: #{tpu_custom_call.1} parent=55 // pred_fallthru
          _
        // Predicated region
        $region61: #{tpu_custom_call.1} parent=55 // pred_check
          %p1082 = pneg %p231
        $region62: #{tpu_custom_call.1} parent=55 // pred_check_branch
          %1084 = sbr.rel (%p1082) target = $region64
        $region63: #{tpu_custom_call.1} parent=55 // pred_region
          %s1085 = sand.u32 %s216, 1
          %s1086 = scalar_lea.sflag [#allocation5], %s1085
          %s1087 = sand.u32 %s216, 1
          %s1088 = smul.addr %s1087, 32
          %s1089 = scalar_lea.vmem [#allocation4], %s1088
          %1090 = dma.done %s1086, 512
        $region64: #{tpu_custom_call.1} parent=55 // pred_fallthru
          _
      $region56: #{tpu_custom_call.1} parent=5 // pred_fallthru
        _
    $region6: #{tpu_custom_call.1} parent=1 // loop_footer
      %s24 = sadd.s32 1, %s20
    $region7: #{tpu_custom_call.1} parent=1 // loop_footer_branch
      %19 = sbr.rel target = $region3
    $region8: #{tpu_custom_call.1} parent=1 // loop_exit
      _
    %1091 = vsyncpa [#allocation3], 1
    %s1092 = scalar_lea.sflag [#allocation3], 1
    %1093 = vsyncpa %s1092, 1
    %1094 = vsyncpa [#allocation5], 1
    %s1095 = scalar_lea.sflag [#allocation5], 1
    %1096 = vsyncpa %s1095, 1

</llo_original>
